<compile_context>
chip_gen: v7x
topology: tpu7x:2x2x1
jax: 0.10.0
libtpu: 0.0.40
codegen_flags: <defaults>
</compile_context>

<pallas_src>
import functools

import jax
import jax.numpy as jnp
from jax.experimental import pallas as pl
from jax.experimental.pallas import tpu as pltpu

EPS = 1e-8  # matches the module's BatchNorm1d(eps=1e-08)
F_IN, H, F_OUT = 18, 300, 1


def _mlp_kernel(xt_ref, w1_ref, fb1_ref, w2_ref, fb2_ref, w3_ref, fb3_ref,
                out_ref):
    """Transposed-orientation fused MLP (batch on the lane axis).

    xt_ref : (18, tb)  bf16   input tile, batch on lanes
    w1_ref : (300, 18) bf16   BN1 folded in
    w2_ref : (300,300) bf16   BN2 folded in
    w3_ref : (300, 1)  f32    final projection as a column (VPU/XLU path)
    fb*    : folded biases (f32 columns / scalar)
    out_ref: (1, tb)   f32    lane-dense output row
    """
    # TODO(synk): training-mode dropout / batch-stat BN not implemented (eval only).
    xt = xt_ref[...]                                                  # (18, tb) bf16
    h1 = jnp.dot(w1_ref[...], xt,
                 preferred_element_type=jnp.float32) + fb1_ref[...]   # (300, tb) f32
    h1 = jnp.maximum(h1, 0.0).astype(jnp.bfloat16)                    # single live copy
    h2 = jnp.dot(w2_ref[...], h1,
                 preferred_element_type=jnp.float32) + fb2_ref[...]   # (300, tb) f32
    h2 = jnp.maximum(h2, 0.0)
    # Layer 3 (300 -> 1) off the MXU: VPU multiply + sublane reduce -> (1, tb).
    out_ref[...] = jnp.sum(h2 * w3_ref[...], axis=0, keepdims=True) + fb3_ref[...]


def _round_up(n, m):
    return ((n + m - 1) // m) * m


def _pick_tile_b(B, max_tile_b):
    """Lane-dim tile: multiple of 128, balanced across tiles for ragged B,
    and >= 2 tiles for large batches so v7x's two TensorCores both get work."""
    max_tile_b = max(128, (max_tile_b // 128) * 128)
    if B <= 1024:
        n_tiles = 1
    else:
        n_tiles = max(2, -(-B // max_tile_b))
    return min(max_tile_b, _round_up(-(-B // n_tiles), 128))


@functools.partial(jax.jit, static_argnames=("tile_b",))
def three_layer_net_forward(x, folded, tile_b=4096):
    """x: (B, 18) float32 -> (B, 1) float32 (eval-mode forward)."""
    B = x.shape[0]
    tb = _pick_tile_b(B, tile_b)
    Bp = _round_up(B, tb)

    # Single cheap XLA transpose+cast so the kernel sees batch on the lane axis.
    xt = x.T.astype(jnp.bfloat16)                       # (18, B)
    if Bp != B:
        xt = jnp.pad(xt, ((0, 0), (0, Bp - B)))         # zero cols, sliced off below

    grid = (Bp // tb,)
    const = lambda i: (0, 0)
    out_row = pl.pallas_call(
        _mlp_kernel,
        out_shape=jax.ShapeDtypeStruct((1, Bp), jnp.float32),
        grid=grid,
        in_specs=[
            pl.BlockSpec((F_IN, tb), lambda i: (0, i)),   # x^T tile (bf16)
            pl.BlockSpec((H, F_IN), const),               # w1 (folded, bf16)
            pl.BlockSpec((H, 1), const),                  # fb1 (f32 column)
            pl.BlockSpec((H, H), const),                  # w2 (folded, bf16)
            pl.BlockSpec((H, 1), const),                  # fb2 (f32 column)
            pl.BlockSpec((H, 1), const),                  # w3 column (f32)
            pl.BlockSpec((1, 1), const),                  # fb3 scalar
        ],
        out_specs=pl.BlockSpec((1, tb), lambda i: (0, i)),  # lane-dense output
        compiler_params=pltpu.CompilerParams(
            dimension_semantics=("parallel",),
            vmem_limit_bytes=48 * 1024 * 1024,
        ),
    )(xt, folded["w1"], folded["fb1"], folded["w2"], folded["fb2"],
      folded["w3"], folded["fb3"])
    return out_row[0, :B][:, None]                      # (B, 1) f32


def init_params(key):
    """Deterministic synthetic params with the PyTorch module's shapes/init."""
    ks = jax.random.split(key, 12)

    def lin(kw, kb, fan_in, fan_out):
        bound = 1.0 / jnp.sqrt(fan_in)
        w = jax.random.uniform(kw, (fan_out, fan_in), jnp.float32, -bound, bound)
        b = jax.random.uniform(kb, (fan_out,), jnp.float32, -bound, bound)
        return w, b

    w1, lb1 = lin(ks[0], ks[1], F_IN, H)
    w2, lb2 = lin(ks[2], ks[3], H, H)
    w3, lb3 = lin(ks[4], ks[5], H, F_OUT)

    g1 = 1.0 + 0.1 * jax.random.normal(ks[6], (F_IN,), jnp.float32)
    b1 = 0.1 * jax.random.normal(ks[7], (F_IN,), jnp.float32)
    rm1 = 0.5 * jax.random.normal(ks[8], (F_IN,), jnp.float32)
    rv1 = jnp.abs(1.0 + 0.1 * jax.random.normal(ks[9], (F_IN,), jnp.float32))

    g2 = jnp.ones((H,), jnp.float32)
    b2 = jnp.zeros((H,), jnp.float32)
    rm2 = 0.1 * jax.random.normal(ks[10], (H,), jnp.float32)
    rv2 = jnp.abs(1.0 + 0.1 * jax.random.normal(ks[11], (H,), jnp.float32))

    return {"w1": w1, "lb1": lb1, "w2": w2, "lb2": lb2, "w3": w3, "lb3": lb3,
            "g1": g1, "b1": b1, "rm1": rm1, "rv1": rv1,
            "g2": g2, "b2": b2, "rm2": rm2, "rv2": rv2}


def fold_params(p):
    """One-time constant transform: fold eval-mode BNs into the Linears, keep
    weights in the transposed-orientation layouts, cast matmul weights to bf16."""
    s1 = p["g1"] / jnp.sqrt(p["rv1"] + EPS)           # (18,)
    t1 = p["b1"] - p["rm1"] * s1
    w1f = p["w1"] * s1[None, :]                       # (300, 18)
    fb1 = p["lb1"] + p["w1"] @ t1                     # (300,)

    s2 = p["g2"] / jnp.sqrt(p["rv2"] + EPS)           # (300,)
    t2 = p["b2"] - p["rm2"] * s2
    w2f = p["w2"] * s2[None, :]                       # (300, 300)
    fb2 = p["lb2"] + p["w2"] @ t2                     # (300,)

    return {
        "w1": w1f.astype(jnp.bfloat16),               # (300, 18)  bf16
        "fb1": fb1[:, None].astype(jnp.float32),      # (300, 1)   f32
        "w2": w2f.astype(jnp.bfloat16),               # (300, 300) bf16
        "fb2": fb2[:, None].astype(jnp.float32),      # (300, 1)   f32
        "w3": p["w3"].T.astype(jnp.float32),          # (300, 1)   f32 (VPU path)
        "fb3": p["lb3"].reshape(1, 1).astype(jnp.float32),
    }


def _reference_full(x, p):
    """Pure-JAX f32 reference of the original (un-folded) eval-mode forward."""
    xn = (x - p["rm1"]) / jnp.sqrt(p["rv1"] + EPS) * p["g1"] + p["b1"]
    h1 = jnp.maximum(xn @ p["w1"].T + p["lb1"], 0.0)
    h1n = (h1 - p["rm2"]) / jnp.sqrt(p["rv2"] + EPS) * p["g2"] + p["b2"]
    h2 = jnp.maximum(h1n @ p["w2"].T + p["lb2"], 0.0)
    return h2 @ p["w3"].T + p["lb3"]


def _reference_folded(x, f):
    """Mirrors the kernel's math exactly (transposed orientation, folded params,
    bf16 MXU operands with f32 accumulation)."""
    xt = x.T.astype(jnp.bfloat16)
    h1 = jnp.maximum(jnp.dot(f["w1"], xt, preferred_element_type=jnp.float32)
                     + f["fb1"], 0.0).astype(jnp.bfloat16)
    h2 = jnp.maximum(jnp.dot(f["w2"], h1, preferred_element_type=jnp.float32)
                     + f["fb2"], 0.0)
    out = jnp.sum(h2 * f["w3"], axis=0, keepdims=True) + f["fb3"]
    return out.T


if __name__ == "__main__":
    key = jax.random.PRNGKey(0)
    k_x, k_p = jax.random.split(key)

    B = 8
    x = jax.random.normal(k_x, (B, F_IN), jnp.float32)
    raw = init_params(k_p)
    folded = fold_params(raw)

    out = three_layer_net_forward(x, folded)
    out = jax.block_until_ready(out)
    assert out.shape == (B, F_OUT), out.shape

    # Exact-semantics check against a reference that mirrors the kernel math.
    ref_exact = _reference_folded(x, folded)
    assert jnp.allclose(out, ref_exact, atol=2e-3, rtol=2e-3), "mismatch vs folded ref"

    # Looser check against the original full-precision module semantics
    # (difference is only bf16 weight/activation rounding on the MXU path).
    ref_full = _reference_full(x, raw)
    assert jnp.allclose(out, ref_full, atol=1e-1, rtol=1e-1), "mismatch vs f32 ref"

    print("KERNEL_OK")
</pallas_src>

<mosaic_0001>
module attributes {stable_mosaic.version = 11 : i64} {
  func.func @_mlp_kernel(%arg0: i32, %arg1: memref<18x128xbf16, #tpu.memory_space<vmem>>, %arg2: memref<300x18xbf16, #tpu.memory_space<vmem>>, %arg3: memref<300x1xf32, #tpu.memory_space<vmem>>, %arg4: memref<300x300xbf16, #tpu.memory_space<vmem>>, %arg5: memref<300x1xf32, #tpu.memory_space<vmem>>, %arg6: memref<300x1xf32, #tpu.memory_space<vmem>>, %arg7: memref<1x1xf32, #tpu.memory_space<vmem>>, %arg8: memref<1x128xf32, #tpu.memory_space<vmem>>) attributes {dimension_semantics = [#tpu.dimension_semantics<parallel>], iteration_bounds = array<i64: 1>, scalar_prefetch = 0 : i64, scratch_operands = 0 : i64, tpu.core_type = #tpu.core_type<tc>, window_params = [{transform_indices = @transform_0, window_bounds = array<i64: 18, 128>}, {pipeline_mode = #tpu.pipeline_mode<synchronous>, transform_indices = @transform_1, window_bounds = array<i64: 300, 18>}, {pipeline_mode = #tpu.pipeline_mode<synchronous>, transform_indices = @transform_2, window_bounds = array<i64: 300, 1>}, {pipeline_mode = #tpu.pipeline_mode<synchronous>, transform_indices = @transform_3, window_bounds = array<i64: 300, 300>}, {pipeline_mode = #tpu.pipeline_mode<synchronous>, transform_indices = @transform_4, window_bounds = array<i64: 300, 1>}, {pipeline_mode = #tpu.pipeline_mode<synchronous>, transform_indices = @transform_5, window_bounds = array<i64: 300, 1>}, {pipeline_mode = #tpu.pipeline_mode<synchronous>, transform_indices = @transform_6, window_bounds = array<i64: 1, 1>}, {transform_indices = @transform_7, window_bounds = array<i64: 1, 128>}]} {
    %c0 = arith.constant 0 : index
    %c0_0 = arith.constant 0 : index
    %0 = vector.load %arg1[%c0, %c0_0] : memref<18x128xbf16, #tpu.memory_space<vmem>>, vector<18x128xbf16>
    %c0_1 = arith.constant 0 : index
    %c0_2 = arith.constant 0 : index
    %1 = vector.load %arg2[%c0_1, %c0_2] : memref<300x18xbf16, #tpu.memory_space<vmem>>, vector<300x18xbf16>
    %cst = arith.constant dense<0.000000e+00> : vector<300x128xf32>
    %2 = tpu.matmul %1, %0, %cst {dimension_numbers = #tpu.dot_dimension_numbers<[1], [0], [0], [1], [0, 0, 1, 1], [], []>} : vector<300x18xbf16>, vector<18x128xbf16>, vector<300x128xf32> -> vector<300x128xf32>
    %c0_3 = arith.constant 0 : index
    %c0_4 = arith.constant 0 : index
    %3 = vector.load %arg3[%c0_3, %c0_4] : memref<300x1xf32, #tpu.memory_space<vmem>>, vector<300x1xf32>
    %4 = vector.broadcast %3 : vector<300x1xf32> to vector<300x128xf32>
    %5 = arith.addf %2, %4 : vector<300x128xf32>
    %cst_5 = arith.constant 0.000000e+00 : f32
    %6 = vector.broadcast %cst_5 : f32 to vector<300x128xf32>
    %7 = arith.maximumf %5, %6 : vector<300x128xf32>
    %8 = arith.truncf %7 : vector<300x128xf32> to vector<300x128xbf16>
    %c0_6 = arith.constant 0 : index
    %c0_7 = arith.constant 0 : index
    %9 = vector.load %arg4[%c0_6, %c0_7] : memref<300x300xbf16, #tpu.memory_space<vmem>>, vector<300x300xbf16>
    %cst_8 = arith.constant dense<0.000000e+00> : vector<300x128xf32>
    %10 = tpu.matmul %9, %8, %cst_8 {dimension_numbers = #tpu.dot_dimension_numbers<[1], [0], [0], [1], [0, 0, 1, 1], [], []>} : vector<300x300xbf16>, vector<300x128xbf16>, vector<300x128xf32> -> vector<300x128xf32>
    %c0_9 = arith.constant 0 : index
    %c0_10 = arith.constant 0 : index
    %11 = vector.load %arg5[%c0_9, %c0_10] : memref<300x1xf32, #tpu.memory_space<vmem>>, vector<300x1xf32>
    %12 = vector.broadcast %11 : vector<300x1xf32> to vector<300x128xf32>
    %13 = arith.addf %10, %12 : vector<300x128xf32>
    %cst_11 = arith.constant 0.000000e+00 : f32
    %14 = vector.broadcast %cst_11 : f32 to vector<300x128xf32>
    %15 = arith.maximumf %13, %14 : vector<300x128xf32>
    %c0_12 = arith.constant 0 : index
    %c0_13 = arith.constant 0 : index
    %16 = vector.load %arg6[%c0_12, %c0_13] : memref<300x1xf32, #tpu.memory_space<vmem>>, vector<300x1xf32>
    %17 = vector.broadcast %16 : vector<300x1xf32> to vector<300x128xf32>
    %18 = arith.mulf %15, %17 : vector<300x128xf32>
    %cst_14 = arith.constant dense<0.000000e+00> : vector<128xf32>
    %19 = vector.multi_reduction <add>, %18, %cst_14 [0] : vector<300x128xf32> to vector<128xf32>
    %20 = vector.shape_cast %19 : vector<128xf32> to vector<1x128xf32>
    %c0_15 = arith.constant 0 : index
    %c0_16 = arith.constant 0 : index
    %21 = vector.load %arg7[%c0_15, %c0_16] : memref<1x1xf32, #tpu.memory_space<vmem>>, vector<1x1xf32>
    %22 = vector.broadcast %21 : vector<1x1xf32> to vector<1x128xf32>
    %23 = arith.addf %20, %22 : vector<1x128xf32>
    %c0_17 = arith.constant 0 : index
    %c0_18 = arith.constant 0 : index
    %24 = vector.load %arg8[%c0_17, %c0_18] : memref<1x128xf32, #tpu.memory_space<vmem>>, vector<1x128xf32>
    tpu.vector_store %arg8[%c0_17, %c0_18], %23 {strides = array<i32>} : memref<1x128xf32, #tpu.memory_space<vmem>>, vector<1x128xf32>,
    return
  }
  func.func @transform_0(%arg0: i32) -> (i32, i32) {
    %c0_i32 = arith.constant 0 : i32
    %c0_i32_0 = arith.constant 0 : i32
    return %c0_i32, %arg0 : i32, i32
  }
  func.func @transform_1(%arg0: i32) -> (i32, i32) {
    %c0_i32 = arith.constant 0 : i32
    %c0_i32_0 = arith.constant 0 : i32
    %c0_i32_1 = arith.constant 0 : i32
    return %c0_i32, %c0_i32_0 : i32, i32
  }
  func.func @transform_2(%arg0: i32) -> (i32, i32) {
    %c0_i32 = arith.constant 0 : i32
    %c0_i32_0 = arith.constant 0 : i32
    %c0_i32_1 = arith.constant 0 : i32
    return %c0_i32, %c0_i32_0 : i32, i32
  }
  func.func @transform_3(%arg0: i32) -> (i32, i32) {
    %c0_i32 = arith.constant 0 : i32
    %c0_i32_0 = arith.constant 0 : i32
    %c0_i32_1 = arith.constant 0 : i32
    return %c0_i32, %c0_i32_0 : i32, i32
  }
  func.func @transform_4(%arg0: i32) -> (i32, i32) {
    %c0_i32 = arith.constant 0 : i32
    %c0_i32_0 = arith.constant 0 : i32
    %c0_i32_1 = arith.constant 0 : i32
    return %c0_i32, %c0_i32_0 : i32, i32
  }
  func.func @transform_5(%arg0: i32) -> (i32, i32) {
    %c0_i32 = arith.constant 0 : i32
    %c0_i32_0 = arith.constant 0 : i32
    %c0_i32_1 = arith.constant 0 : i32
    return %c0_i32, %c0_i32_0 : i32, i32
  }
  func.func @transform_6(%arg0: i32) -> (i32, i32) {
    %c0_i32 = arith.constant 0 : i32
    %c0_i32_0 = arith.constant 0 : i32
    %c0_i32_1 = arith.constant 0 : i32
    return %c0_i32, %c0_i32_0 : i32, i32
  }
  func.func @transform_7(%arg0: i32) -> (i32, i32) {
    %c0_i32 = arith.constant 0 : i32
    %c0_i32_0 = arith.constant 0 : i32
    return %c0_i32, %arg0 : i32, i32
  }
}

</mosaic_0001>

<llo_original>
// kernel: three_layer_net_forward.1
$region0: #{three_layer_net_forward.1}
  #allocation0 [shape = 'u32[]', space=smem, size = 0x4, offset = 0x4, fixed_abs, tag = 'smem constant byte address 0x4 - core index']
  #allocation1 [shape = 'u32[144,128]{1,0:T(1,128)}', space=vmem, size = 0x12000, scoped, tag = 'internal scratch']
  #allocation2 [shape = 'f32[1,1]{1,0:T(1,128)S(1)}', space=vmem, size = 0x200, scoped, tag = 'scoped memory for three_layer_net_forward.1']
  %s0 = inlined_call_operand.vmem [shape: bf16[18,128], index: 0, kind: input, shape index: {}]
  %s1 = inlined_call_operand.vmem [shape: bf16[300,18], index: 1, kind: input, shape index: {}]
  %s2 = inlined_call_operand.vmem [shape: f32[300,1], index: 2, kind: input, shape index: {}]
  %s3 = inlined_call_operand.vmem [shape: bf16[300,300], index: 3, kind: input, shape index: {}]
  %s4 = inlined_call_operand.vmem [shape: f32[300,1], index: 4, kind: input, shape index: {}]
  %s5 = inlined_call_operand.vmem [shape: f32[300,1], index: 5, kind: input, shape index: {}]
  %s6 = inlined_call_operand.<no memory space> [shape: f32[1,1], index: 6, kind: input, shape index: {}]
  %s7 = inlined_call_operand.vmem [shape: f32[1,128], index: 7, kind: output, shape index: {}]
  %s8 = sld [smem:[#allocation0]]
  $region38: #{three_layer_net_forward.1} parent=0
    _
  %s10 = ssub.s32 1, %s8
  %s11 = scalar_select 0, %s10, %s8
  %v12 = vstv %s6
  %13 = vst [vmem:[#allocation2] sm:$0x1] %v12
  // Predicated region
  $region2: #{three_layer_net_forward.1} parent=0 // pred_check
    _
  $region3: #{three_layer_net_forward.1} parent=0 // pred_check_branch
    %15 = sbr.rel (0) target = $region5
  $region4: #{three_layer_net_forward.1} parent=0 // pred_region
    _
  $region5: #{three_layer_net_forward.1} parent=0 // pred_fallthru
    _
  // Predicated region
  $region6: #{three_layer_net_forward.1} parent=0 // pred_check
    _
  $region7: #{three_layer_net_forward.1} parent=0 // pred_check_branch
    %17 = sbr.rel (0) target = $region9
  $region8: #{three_layer_net_forward.1} parent=0 // pred_region
    _
  $region9: #{three_layer_net_forward.1} parent=0 // pred_fallthru
    _
  // Predicated region
  $region10: #{three_layer_net_forward.1} parent=0 // pred_check
    _
  $region11: #{three_layer_net_forward.1} parent=0 // pred_check_branch
    %19 = sbr.rel (0) target = $region13
  $region12: #{three_layer_net_forward.1} parent=0 // pred_region
    _
  $region13: #{three_layer_net_forward.1} parent=0 // pred_fallthru
    _
  // Predicated region
  $region14: #{three_layer_net_forward.1} parent=0 // pred_check
    _
  $region15: #{three_layer_net_forward.1} parent=0 // pred_check_branch
    %21 = sbr.rel (0) target = $region17
  $region16: #{three_layer_net_forward.1} parent=0 // pred_region
    _
  $region17: #{three_layer_net_forward.1} parent=0 // pred_fallthru
    _
  // Predicated region
  $region18: #{three_layer_net_forward.1} parent=0 // pred_check
    _
  $region19: #{three_layer_net_forward.1} parent=0 // pred_check_branch
    %23 = sbr.rel (0) target = $region21
  $region20: #{three_layer_net_forward.1} parent=0 // pred_region
    _
  $region21: #{three_layer_net_forward.1} parent=0 // pred_fallthru
    _
  // Predicated region
  $region22: #{three_layer_net_forward.1} parent=0 // pred_check
    _
  $region23: #{three_layer_net_forward.1} parent=0 // pred_check_branch
    %25 = sbr.rel (0) target = $region25
  $region24: #{three_layer_net_forward.1} parent=0 // pred_region
    _
  $region25: #{three_layer_net_forward.1} parent=0 // pred_fallthru
    _
  // Predicated region
  $region26: #{three_layer_net_forward.1} parent=0 // pred_check
    _
  $region27: #{three_layer_net_forward.1} parent=0 // pred_check_branch
    %27 = sbr.rel (0) target = $region29
  $region28: #{three_layer_net_forward.1} parent=0 // pred_region
    _
  $region29: #{three_layer_net_forward.1} parent=0 // pred_fallthru
    _
  %v29 = vld [vmem:[%s0] sm:$0xf]
  %v30 = vld [vmem:[%s0 + $0x4] sm:$0xf]
  %v31 = vld [vmem:[%s0 + $0x8] sm:$0x1]
  %v32 = vld [vmem:[%s1] sm:$0xf]
  %v33 = vld [vmem:[%s1 + $0x4] sm:$0xf]
  %v34 = vld [vmem:[%s1 + $0x8] sm:$0xf]
  %v35 = vld [vmem:[%s1 + $0xc] sm:$0xf]
  %v36 = vld [vmem:[%s1 + $0x10] sm:$0xf]
  %v37 = vld [vmem:[%s1 + $0x14] sm:$0xf]
  %v38 = vld [vmem:[%s1 + $0x18] sm:$0xf]
  %v39 = vld [vmem:[%s1 + $0x1c] sm:$0xf]
  %v40 = vld [vmem:[%s1 + $0x20] sm:$0xf]
  %v41 = vld [vmem:[%s1 + $0x24] sm:$0xf]
  %v42 = vld [vmem:[%s1 + $0x28] sm:$0xf]
  %v43 = vld [vmem:[%s1 + $0x2c] sm:$0xf]
  %v44 = vld [vmem:[%s1 + $0x30] sm:$0xf]
  %v45 = vld [vmem:[%s1 + $0x34] sm:$0xf]
  %v46 = vld [vmem:[%s1 + $0x38] sm:$0xf]
  %v47 = vld [vmem:[%s1 + $0x3c] sm:$0xf]
  %v48 = vld [vmem:[%s1 + $0x40] sm:$0xf]
  %v49 = vld [vmem:[%s1 + $0x44] sm:$0xf]
  %v50 = vld [vmem:[%s1 + $0x48] sm:$0xf]
  %v51 = vld [vmem:[%s1 + $0x4c] sm:$0xf]
  %v52 = vld [vmem:[%s1 + $0x50] sm:$0xf]
  %v53 = vld [vmem:[%s1 + $0x54] sm:$0xf]
  %v54 = vld [vmem:[%s1 + $0x58] sm:$0xf]
  %v55 = vld [vmem:[%s1 + $0x5c] sm:$0xf]
  %v56 = vld [vmem:[%s1 + $0x60] sm:$0xf]
  %v57 = vld [vmem:[%s1 + $0x64] sm:$0xf]
  %v58 = vld [vmem:[%s1 + $0x68] sm:$0xf]
  %v59 = vld [vmem:[%s1 + $0x6c] sm:$0xf]
  %v60 = vld [vmem:[%s1 + $0x70] sm:$0xf]
  %v61 = vld [vmem:[%s1 + $0x74] sm:$0xf]
  %v62 = vld [vmem:[%s1 + $0x78] sm:$0xf]
  %v63 = vld [vmem:[%s1 + $0x7c] sm:$0xf]
  %v64 = vld [vmem:[%s1 + $0x80] sm:$0xf]
  %v65 = vld [vmem:[%s1 + $0x84] sm:$0xf]
  %v66 = vld [vmem:[%s1 + $0x88] sm:$0xf]
  %v67 = vld [vmem:[%s1 + $0x8c] sm:$0xf]
  %v68 = vld [vmem:[%s1 + $0x90] sm:$0xf]
  %v69 = vld [vmem:[%s1 + $0x94] sm:$0x3]
  %v70 = vld [vmem:[%s2] sm:$0xff]
  %v71 = vld [vmem:[%s2 + $0x8] sm:$0xff]
  %v72 = vld [vmem:[%s2 + $0x10] sm:$0xff]
  %v73 = vld [vmem:[%s2 + $0x18] sm:$0xff]
  %v74 = vld [vmem:[%s2 + $0x20] sm:$0xff]
  %v75 = vld [vmem:[%s2 + $0x28] sm:$0xff]
  %v76 = vld [vmem:[%s2 + $0x30] sm:$0xff]
  %v77 = vld [vmem:[%s2 + $0x38] sm:$0xff]
  %v78 = vld [vmem:[%s2 + $0x40] sm:$0xff]
  %v79 = vld [vmem:[%s2 + $0x48] sm:$0xff]
  %v80 = vld [vmem:[%s2 + $0x50] sm:$0xff]
  %v81 = vld [vmem:[%s2 + $0x58] sm:$0xff]
  %v82 = vld [vmem:[%s2 + $0x60] sm:$0xff]
  %v83 = vld [vmem:[%s2 + $0x68] sm:$0xff]
  %v84 = vld [vmem:[%s2 + $0x70] sm:$0xff]
  %v85 = vld [vmem:[%s2 + $0x78] sm:$0xff]
  %v86 = vld [vmem:[%s2 + $0x80] sm:$0xff]
  %v87 = vld [vmem:[%s2 + $0x88] sm:$0xff]
  %v88 = vld [vmem:[%s2 + $0x90] sm:$0xff]
  %v89 = vld [vmem:[%s2 + $0x98] sm:$0xff]
  %v90 = vld [vmem:[%s2 + $0xa0] sm:$0xff]
  %v91 = vld [vmem:[%s2 + $0xa8] sm:$0xff]
  %v92 = vld [vmem:[%s2 + $0xb0] sm:$0xff]
  %v93 = vld [vmem:[%s2 + $0xb8] sm:$0xff]
  %v94 = vld [vmem:[%s2 + $0xc0] sm:$0xff]
  %v95 = vld [vmem:[%s2 + $0xc8] sm:$0xff]
  %v96 = vld [vmem:[%s2 + $0xd0] sm:$0xff]
  %v97 = vld [vmem:[%s2 + $0xd8] sm:$0xff]
  %v98 = vld [vmem:[%s2 + $0xe0] sm:$0xff]
  %v99 = vld [vmem:[%s2 + $0xe8] sm:$0xff]
  %v100 = vld [vmem:[%s2 + $0xf0] sm:$0xff]
  %v101 = vld [vmem:[%s2 + $0xf8] sm:$0xff]
  %v102 = vld [vmem:[%s2 + $0x100] sm:$0xff]
  %v103 = vld [vmem:[%s2 + $0x108] sm:$0xff]
  %v104 = vld [vmem:[%s2 + $0x110] sm:$0xff]
  %v105 = vld [vmem:[%s2 + $0x118] sm:$0xff]
  %v106 = vld [vmem:[%s2 + $0x120] sm:$0xff]
  %v107 = vld [vmem:[%s2 + $0x128] sm:$0xf]
  %109 = vset.pattern.permute.xlu0 0
  %110 = vperm.xlu0 %109, %v70
  %v111 = vpop.permute.xlu0 %110
  %114 = vset.pattern.permute.xlu0 0
  %115 = vperm.xlu0 %114, %v71
  %v116 = vpop.permute.xlu0 %115
  %119 = vset.pattern.permute.xlu0 0
  %120 = vperm.xlu0 %119, %v72
  %v121 = vpop.permute.xlu0 %120
  %124 = vset.pattern.permute.xlu0 0
  %125 = vperm.xlu0 %124, %v73
  %v126 = vpop.permute.xlu0 %125
  %129 = vset.pattern.permute.xlu0 0
  %130 = vperm.xlu0 %129, %v74
  %v131 = vpop.permute.xlu0 %130
  %134 = vset.pattern.permute.xlu0 0
  %135 = vperm.xlu0 %134, %v75
  %v136 = vpop.permute.xlu0 %135
  %139 = vset.pattern.permute.xlu0 0
  %140 = vperm.xlu0 %139, %v76
  %v141 = vpop.permute.xlu0 %140
  %144 = vset.pattern.permute.xlu0 0
  %145 = vperm.xlu0 %144, %v77
  %v146 = vpop.permute.xlu0 %145
  %149 = vset.pattern.permute.xlu0 0
  %150 = vperm.xlu0 %149, %v78
  %v151 = vpop.permute.xlu0 %150
  %154 = vset.pattern.permute.xlu0 0
  %155 = vperm.xlu0 %154, %v79
  %v156 = vpop.permute.xlu0 %155
  %159 = vset.pattern.permute.xlu0 0
  %160 = vperm.xlu0 %159, %v80
  %v161 = vpop.permute.xlu0 %160
  %164 = vset.pattern.permute.xlu0 0
  %165 = vperm.xlu0 %164, %v81
  %v166 = vpop.permute.xlu0 %165
  %169 = vset.pattern.permute.xlu0 0
  %170 = vperm.xlu0 %169, %v82
  %v171 = vpop.permute.xlu0 %170
  %174 = vset.pattern.permute.xlu0 0
  %175 = vperm.xlu0 %174, %v83
  %v176 = vpop.permute.xlu0 %175
  %179 = vset.pattern.permute.xlu0 0
  %180 = vperm.xlu0 %179, %v84
  %v181 = vpop.permute.xlu0 %180
  %184 = vset.pattern.permute.xlu0 0
  %185 = vperm.xlu0 %184, %v85
  %v186 = vpop.permute.xlu0 %185
  %189 = vset.pattern.permute.xlu0 0
  %190 = vperm.xlu0 %189, %v86
  %v191 = vpop.permute.xlu0 %190
  %194 = vset.pattern.permute.xlu0 0
  %195 = vperm.xlu0 %194, %v87
  %v196 = vpop.permute.xlu0 %195
  %199 = vset.pattern.permute.xlu0 0
  %200 = vperm.xlu0 %199, %v88
  %v201 = vpop.permute.xlu0 %200
  %204 = vset.pattern.permute.xlu0 0
  %205 = vperm.xlu0 %204, %v89
  %v206 = vpop.permute.xlu0 %205
  %209 = vset.pattern.permute.xlu0 0
  %210 = vperm.xlu0 %209, %v90
  %v211 = vpop.permute.xlu0 %210
  %214 = vset.pattern.permute.xlu0 0
  %215 = vperm.xlu0 %214, %v91
  %v216 = vpop.permute.xlu0 %215
  %219 = vset.pattern.permute.xlu0 0
  %220 = vperm.xlu0 %219, %v92
  %v221 = vpop.permute.xlu0 %220
  %224 = vset.pattern.permute.xlu0 0
  %225 = vperm.xlu0 %224, %v93
  %v226 = vpop.permute.xlu0 %225
  %229 = vset.pattern.permute.xlu0 0
  %230 = vperm.xlu0 %229, %v94
  %v231 = vpop.permute.xlu0 %230
  %234 = vset.pattern.permute.xlu0 0
  %235 = vperm.xlu0 %234, %v95
  %v236 = vpop.permute.xlu0 %235
  %239 = vset.pattern.permute.xlu0 0
  %240 = vperm.xlu0 %239, %v96
  %v241 = vpop.permute.xlu0 %240
  %244 = vset.pattern.permute.xlu0 0
  %245 = vperm.xlu0 %244, %v97
  %v246 = vpop.permute.xlu0 %245
  %249 = vset.pattern.permute.xlu0 0
  %250 = vperm.xlu0 %249, %v98
  %v251 = vpop.permute.xlu0 %250
  %254 = vset.pattern.permute.xlu0 0
  %255 = vperm.xlu0 %254, %v99
  %v256 = vpop.permute.xlu0 %255
  %259 = vset.pattern.permute.xlu0 0
  %260 = vperm.xlu0 %259, %v100
  %v261 = vpop.permute.xlu0 %260
  %264 = vset.pattern.permute.xlu0 0
  %265 = vperm.xlu0 %264, %v101
  %v266 = vpop.permute.xlu0 %265
  %269 = vset.pattern.permute.xlu0 0
  %270 = vperm.xlu0 %269, %v102
  %v271 = vpop.permute.xlu0 %270
  %274 = vset.pattern.permute.xlu0 0
  %275 = vperm.xlu0 %274, %v103
  %v276 = vpop.permute.xlu0 %275
  %279 = vset.pattern.permute.xlu0 0
  %280 = vperm.xlu0 %279, %v104
  %v281 = vpop.permute.xlu0 %280
  %284 = vset.pattern.permute.xlu0 0
  %285 = vperm.xlu0 %284, %v105
  %v286 = vpop.permute.xlu0 %285
  %289 = vset.pattern.permute.xlu0 0
  %290 = vperm.xlu0 %289, %v106
  %v291 = vpop.permute.xlu0 %290
  %294 = vset.pattern.permute.xlu0 0
  %295 = vperm.xlu0 %294, %v107
  %v296 = vpop.permute.xlu0 %295
  %v336 = vunpack.c.l.b16 %v32
  %v337 = vunpack.c.l.b16 %v33
  %v338 = vunpack.c.l.b16 %v34
  %v339 = vunpack.c.l.b16 %v35
  %v340 = vunpack.c.l.b16 %v36
  %v341 = vunpack.c.l.b16 %v37
  %v342 = vunpack.c.l.b16 %v38
  %v343 = vunpack.c.l.b16 %v39
  %v344 = vunpack.c.l.b16 %v40
  %v345 = vunpack.c.l.b16 %v41
  %v346 = vunpack.c.l.b16 %v42
  %v347 = vunpack.c.l.b16 %v43
  %v348 = vunpack.c.l.b16 %v44
  %v349 = vunpack.c.l.b16 %v45
  %v350 = vunpack.c.l.b16 %v46
  %v351 = vunpack.c.l.b16 %v47
  %v352 = vunpack.c.l.b16 %v48
  %v353 = vunpack.c.l.b16 %v49
  %v354 = vunpack.c.l.b16 %v50
  %v355 = vunpack.c.l.b16 %v51
  %v356 = vunpack.c.l.b16 %v52
  %v357 = vunpack.c.l.b16 %v53
  %v358 = vunpack.c.l.b16 %v54
  %v359 = vunpack.c.l.b16 %v55
  %v360 = vunpack.c.l.b16 %v56
  %v361 = vunpack.c.l.b16 %v57
  %v362 = vunpack.c.l.b16 %v58
  %v363 = vunpack.c.l.b16 %v59
  %v364 = vunpack.c.l.b16 %v60
  %v365 = vunpack.c.l.b16 %v61
  %v366 = vunpack.c.l.b16 %v62
  %v367 = vunpack.c.l.b16 %v63
  %v368 = vunpack.c.l.b16 %v64
  %v369 = vunpack.c.l.b16 %v65
  %v370 = vunpack.c.l.b16 %v66
  %v371 = vunpack.c.l.b16 %v67
  %v372 = vunpack.c.l.b16 %v68
  %v373 = vunpack.c.l.b16 %v69
  %v374 = vpack.c.b16 %v337, %v336
  %v375 = vpack.c.b16 %v339, %v338
  %v376 = vpack.c.b16 %v341, %v340
  %v377 = vpack.c.b16 %v343, %v342
  %v378 = vpack.c.b16 %v345, %v344
  %v379 = vpack.c.b16 %v347, %v346
  %v380 = vpack.c.b16 %v349, %v348
  %v381 = vpack.c.b16 %v351, %v350
  %v382 = vpack.c.b16 %v353, %v352
  %v383 = vpack.c.b16 %v355, %v354
  %v384 = vpack.c.b16 %v357, %v356
  %v385 = vpack.c.b16 %v359, %v358
  %v386 = vpack.c.b16 %v361, %v360
  %v387 = vpack.c.b16 %v363, %v362
  %v388 = vpack.c.b16 %v365, %v364
  %v389 = vpack.c.b16 %v367, %v366
  %v390 = vpack.c.b16 %v369, %v368
  %v391 = vpack.c.b16 %v371, %v370
  %v392 = vpack.c.b16 %v373, %v372
  %v396 = vunpack.c.l.b16 %v29
  %v397 = vunpack.c.l.b16 %v30
  %v398 = vunpack.c.l.b16 %v31
  %v399 = vpack.c.b16 %v397, %v396
  %v400 = vpack.c.b16 %v398, %v398
  %vm402 = vcmask 146432
  %v404 = vsel %vm402, %v374, 0
  %v407 = vsel %vm402, %v375, 0
  %v410 = vsel %vm402, %v376, 0
  %v413 = vsel %vm402, %v377, 0
  %v416 = vsel %vm402, %v378, 0
  %v419 = vsel %vm402, %v379, 0
  %v422 = vsel %vm402, %v380, 0
  %v425 = vsel %vm402, %v381, 0
  %v428 = vsel %vm402, %v382, 0
  %v431 = vsel %vm402, %v383, 0
  %v434 = vsel %vm402, %v384, 0
  %v437 = vsel %vm402, %v385, 0
  %v440 = vsel %vm402, %v386, 0
  %v443 = vsel %vm402, %v387, 0
  %v446 = vsel %vm402, %v388, 0
  %v449 = vsel %vm402, %v389, 0
  %v452 = vsel %vm402, %v390, 0
  %v455 = vsel %vm402, %v391, 0
  %v458 = vsel %vm402, %v392, 0
  %vm460 = vcmask 1040384
  %v462 = vsel %vm460, %v400, 0
  %464 = vmatprep.subr.bf16.mxu0 0
  %465 = vmatpush1.bf16.msra.mxu0 %v399
  %466 = vmatprep.subr.bf16.mxu0 0
  %467 = vmatpush1.bf16.msra.mxu0 %v462
  %468 = vmatprep.subr.bf16.mxu0 0
  %469 = vmatpush1.bf16.msra.mxu0 0
  %470 = vmatprep.subr.bf16.mxu0 0
  %471 = vmatpush1.bf16.msra.mxu0 0
  %472 = vmatprep.subr.bf16.mxu0 0
  %473 = vmatpush1.bf16.msra.mxu0 0
  %474 = vmatprep.subr.bf16.mxu0 0
  %475 = vmatpush1.bf16.msra.mxu0 0
  %476 = vmatprep.subr.bf16.mxu0 0
  %477 = vmatpush1.bf16.msra.mxu0 0
  %478 = vmatprep.subr.bf16.mxu0 0
  %479 = vmatpush1.bf16.msra.mxu0 0
  %480 = vmatprep.subr.bf16.mxu0 0
  %481 = vmatpush1.bf16.msra.mxu0 0
  %482 = vmatprep.subr.bf16.mxu0 0
  %483 = vmatpush1.bf16.msra.mxu0 0
  %484 = vmatprep.subr.bf16.mxu0 0
  %485 = vmatpush1.bf16.msra.mxu0 0
  %486 = vmatprep.subr.bf16.mxu0 0
  %487 = vmatpush1.bf16.msra.mxu0 0
  %488 = vmatprep.subr.bf16.mxu0 0
  %489 = vmatpush1.bf16.msra.mxu0 0
  %490 = vmatprep.subr.bf16.mxu0 0
  %491 = vmatpush1.bf16.msra.mxu0 0
  %492 = vmatprep.subr.bf16.mxu0 0
  %493 = vmatpush1.bf16.msra.mxu0 0
  %494 = vmatprep.subr.bf16.mxu0 0
  %495 = vmatpush1.bf16.msra.mxu0 0
  %496 = vmatprep.mubr.bf16.mxu0 0
  %497 = vmatmul.mubr.bf16.gmra.mrb[0].mxu0 %v404
  %v498 = vpop.f32.mrb[0].mxu0
  %v499 = vadd.f32 %v111, %v498
  %v500 = vpop.f32.mrb[0].mxu0
  %v501 = vpop.f32.mrb[0].mxu0
  %v502 = vadd.f32 %v116, %v501
  %v503 = vpop.f32.mrb[0].mxu0
  %504 = vmatprep.mubr.bf16.mxu0 0
  %505 = vmatmul.mubr.bf16.gmra.mrb[0].mxu0 %v407
  %v506 = vpop.f32.mrb[0].mxu0
  %v507 = vadd.f32 %v121, %v506
  %v508 = vpop.f32.mrb[0].mxu0
  %v509 = vpop.f32.mrb[0].mxu0
  %v510 = vadd.f32 %v126, %v509
  %v511 = vpop.f32.mrb[0].mxu0
  %512 = vmatprep.mubr.bf16.mxu0 0
  %513 = vmatmul.mubr.bf16.gmra.mrb[0].mxu0 %v410
  %v514 = vpop.f32.mrb[0].mxu0
  %v515 = vadd.f32 %v131, %v514
  %v516 = vpop.f32.mrb[0].mxu0
  %v517 = vpop.f32.mrb[0].mxu0
  %v518 = vadd.f32 %v136, %v517
  %v519 = vpop.f32.mrb[0].mxu0
  %520 = vmatprep.mubr.bf16.mxu0 0
  %521 = vmatmul.mubr.bf16.gmra.mrb[0].mxu0 %v413
  %v522 = vpop.f32.mrb[0].mxu0
  %v523 = vadd.f32 %v141, %v522
  %v524 = vpop.f32.mrb[0].mxu0
  %v525 = vpop.f32.mrb[0].mxu0
  %v526 = vadd.f32 %v146, %v525
  %v527 = vpop.f32.mrb[0].mxu0
  %528 = vmatprep.mubr.bf16.mxu0 0
  %529 = vmatmul.mubr.bf16.gmra.mrb[0].mxu0 %v416
  %v530 = vpop.f32.mrb[0].mxu0
  %v531 = vadd.f32 %v151, %v530
  %v532 = vpop.f32.mrb[0].mxu0
  %v533 = vpop.f32.mrb[0].mxu0
  %v534 = vadd.f32 %v156, %v533
  %v535 = vpop.f32.mrb[0].mxu0
  %536 = vmatprep.mubr.bf16.mxu0 0
  %537 = vmatmul.mubr.bf16.gmra.mrb[0].mxu0 %v419
  %v538 = vpop.f32.mrb[0].mxu0
  %v539 = vadd.f32 %v161, %v538
  %v540 = vpop.f32.mrb[0].mxu0
  %v541 = vpop.f32.mrb[0].mxu0
  %v542 = vadd.f32 %v166, %v541
  %v543 = vpop.f32.mrb[0].mxu0
  %544 = vmatprep.mubr.bf16.mxu0 0
  %545 = vmatmul.mubr.bf16.gmra.mrb[0].mxu0 %v422
  %v546 = vpop.f32.mrb[0].mxu0
  %v547 = vadd.f32 %v171, %v546
  %v548 = vpop.f32.mrb[0].mxu0
  %v549 = vpop.f32.mrb[0].mxu0
  %v550 = vadd.f32 %v176, %v549
  %v551 = vpop.f32.mrb[0].mxu0
  %552 = vmatprep.mubr.bf16.mxu0 0
  %553 = vmatmul.mubr.bf16.gmra.mrb[0].mxu0 %v425
  %v554 = vpop.f32.mrb[0].mxu0
  %v555 = vadd.f32 %v181, %v554
  %v556 = vpop.f32.mrb[0].mxu0
  %v557 = vpop.f32.mrb[0].mxu0
  %v558 = vadd.f32 %v186, %v557
  %v559 = vpop.f32.mrb[0].mxu0
  %560 = vmatprep.mubr.bf16.mxu0 0
  %561 = vmatmul.mubr.bf16.gmra.mrb[0].mxu0 %v428
  %v562 = vpop.f32.mrb[0].mxu0
  %v563 = vadd.f32 %v191, %v562
  %v564 = vpop.f32.mrb[0].mxu0
  %v565 = vpop.f32.mrb[0].mxu0
  %v566 = vadd.f32 %v196, %v565
  %v567 = vpop.f32.mrb[0].mxu0
  %568 = vmatprep.mubr.bf16.mxu0 0
  %569 = vmatmul.mubr.bf16.gmra.mrb[0].mxu0 %v431
  %v570 = vpop.f32.mrb[0].mxu0
  %v571 = vadd.f32 %v201, %v570
  %v572 = vpop.f32.mrb[0].mxu0
  %v573 = vpop.f32.mrb[0].mxu0
  %v574 = vadd.f32 %v206, %v573
  %v575 = vpop.f32.mrb[0].mxu0
  %576 = vmatprep.mubr.bf16.mxu0 0
  %577 = vmatmul.mubr.bf16.gmra.mrb[0].mxu0 %v434
  %v578 = vpop.f32.mrb[0].mxu0
  %v579 = vadd.f32 %v211, %v578
  %v580 = vpop.f32.mrb[0].mxu0
  %v581 = vpop.f32.mrb[0].mxu0
  %v582 = vadd.f32 %v216, %v581
  %v583 = vpop.f32.mrb[0].mxu0
  %584 = vmatprep.mubr.bf16.mxu0 0
  %585 = vmatmul.mubr.bf16.gmra.mrb[0].mxu0 %v437
  %v586 = vpop.f32.mrb[0].mxu0
  %v587 = vadd.f32 %v221, %v586
  %v588 = vpop.f32.mrb[0].mxu0
  %v589 = vpop.f32.mrb[0].mxu0
  %v590 = vadd.f32 %v226, %v589
  %v591 = vpop.f32.mrb[0].mxu0
  %592 = vmatprep.mubr.bf16.mxu0 0
  %593 = vmatmul.mubr.bf16.gmra.mrb[0].mxu0 %v440
  %v594 = vpop.f32.mrb[0].mxu0
  %v595 = vadd.f32 %v231, %v594
  %v596 = vpop.f32.mrb[0].mxu0
  %v597 = vpop.f32.mrb[0].mxu0
  %v598 = vadd.f32 %v236, %v597
  %v599 = vpop.f32.mrb[0].mxu0
  %600 = vmatprep.mubr.bf16.mxu0 0
  %601 = vmatmul.mubr.bf16.gmra.mrb[0].mxu0 %v443
  %v602 = vpop.f32.mrb[0].mxu0
  %v603 = vadd.f32 %v241, %v602
  %v604 = vpop.f32.mrb[0].mxu0
  %v605 = vpop.f32.mrb[0].mxu0
  %v606 = vadd.f32 %v246, %v605
  %v607 = vpop.f32.mrb[0].mxu0
  %608 = vmatprep.mubr.bf16.mxu0 0
  %609 = vmatmul.mubr.bf16.gmra.mrb[0].mxu0 %v446
  %v610 = vpop.f32.mrb[0].mxu0
  %v611 = vadd.f32 %v251, %v610
  %v612 = vpop.f32.mrb[0].mxu0
  %v613 = vpop.f32.mrb[0].mxu0
  %v614 = vadd.f32 %v256, %v613
  %v615 = vpop.f32.mrb[0].mxu0
  %616 = vmatprep.mubr.bf16.mxu0 0
  %617 = vmatmul.mubr.bf16.gmra.mrb[0].mxu0 %v449
  %v618 = vpop.f32.mrb[0].mxu0
  %v619 = vadd.f32 %v261, %v618
  %v620 = vpop.f32.mrb[0].mxu0
  %v621 = vpop.f32.mrb[0].mxu0
  %v622 = vadd.f32 %v266, %v621
  %v623 = vpop.f32.mrb[0].mxu0
  %624 = vmatprep.mubr.bf16.mxu0 0
  %625 = vmatmul.mubr.bf16.gmra.mrb[0].mxu0 %v452
  %v626 = vpop.f32.mrb[0].mxu0
  %v627 = vadd.f32 %v271, %v626
  %v628 = vpop.f32.mrb[0].mxu0
  %v629 = vpop.f32.mrb[0].mxu0
  %v630 = vadd.f32 %v276, %v629
  %v631 = vpop.f32.mrb[0].mxu0
  %632 = vmatprep.mubr.bf16.mxu0 0
  %633 = vmatmul.mubr.bf16.gmra.mrb[0].mxu0 %v455
  %v634 = vpop.f32.mrb[0].mxu0
  %v635 = vadd.f32 %v281, %v634
  %v636 = vpop.f32.mrb[0].mxu0
  %v637 = vpop.f32.mrb[0].mxu0
  %v638 = vadd.f32 %v286, %v637
  %v639 = vpop.f32.mrb[0].mxu0
  %640 = vmatprep.mubr.bf16.mxu0 0
  %641 = vmatmul.mubr.bf16.gmra.mrb[0].mxu0 %v458
  %v642 = vpop.f32.mrb[0].mxu0
  %v643 = vadd.f32 %v291, %v642
  %v644 = vpop.f32.mrb[0].mxu0
  %v645 = vpop.f32.mrb[0].mxu0
  %v646 = vadd.f32 %v296, %v645
  %v647 = vpop.f32.mrb[0].mxu0
  %648 = vdwg.mxu0
  %v649 = vmax.f32 %v499, 0.0
  %v650 = vmax.f32 %v502, 0.0
  %v651 = vmax.f32 %v507, 0.0
  %v652 = vmax.f32 %v510, 0.0
  %v653 = vmax.f32 %v515, 0.0
  %v654 = vmax.f32 %v518, 0.0
  %v655 = vmax.f32 %v523, 0.0
  %v656 = vmax.f32 %v526, 0.0
  %v657 = vmax.f32 %v531, 0.0
  %v658 = vmax.f32 %v534, 0.0
  %v659 = vmax.f32 %v539, 0.0
  %v660 = vmax.f32 %v542, 0.0
  %v661 = vmax.f32 %v547, 0.0
  %v662 = vmax.f32 %v550, 0.0
  %v663 = vmax.f32 %v555, 0.0
  %v664 = vmax.f32 %v558, 0.0
  %v665 = vmax.f32 %v563, 0.0
  %v666 = vmax.f32 %v566, 0.0
  %v667 = vmax.f32 %v571, 0.0
  %v668 = vmax.f32 %v574, 0.0
  %v669 = vmax.f32 %v579, 0.0
  %v670 = vmax.f32 %v582, 0.0
  %v671 = vmax.f32 %v587, 0.0
  %v672 = vmax.f32 %v590, 0.0
  %v673 = vmax.f32 %v595, 0.0
  %v674 = vmax.f32 %v598, 0.0
  %v675 = vmax.f32 %v603, 0.0
  %v676 = vmax.f32 %v606, 0.0
  %v677 = vmax.f32 %v611, 0.0
  %v678 = vmax.f32 %v614, 0.0
  %v679 = vmax.f32 %v619, 0.0
  %v680 = vmax.f32 %v622, 0.0
  %v681 = vmax.f32 %v627, 0.0
  %v682 = vmax.f32 %v630, 0.0
  %v683 = vmax.f32 %v635, 0.0
  %v684 = vmax.f32 %v638, 0.0
  %v685 = vmax.f32 %v643, 0.0
  %v686 = vmax.f32 %v646, 0.0
  %v687 = vpack.c.bf16 %v650, %v649
  %v688 = vpack.c.bf16 %v652, %v651
  %v689 = vpack.c.bf16 %v654, %v653
  %v690 = vpack.c.bf16 %v656, %v655
  %v691 = vpack.c.bf16 %v658, %v657
  %v692 = vpack.c.bf16 %v660, %v659
  %v693 = vpack.c.bf16 %v662, %v661
  %v694 = vpack.c.bf16 %v664, %v663
  %v695 = vpack.c.bf16 %v666, %v665
  %v696 = vpack.c.bf16 %v668, %v667
  %v697 = vpack.c.bf16 %v670, %v669
  %v698 = vpack.c.bf16 %v672, %v671
  %v699 = vpack.c.bf16 %v674, %v673
  %v700 = vpack.c.bf16 %v676, %v675
  %v701 = vpack.c.bf16 %v678, %v677
  %v702 = vpack.c.bf16 %v680, %v679
  %v703 = vpack.c.bf16 %v682, %v681
  %v704 = vpack.c.bf16 %v684, %v683
  %v705 = vpack.c.bf16 %v686, %v685
  %v706 = vld [vmem:[%s3] sm:$0xff]
  %v707 = vld [vmem:[%s3 + $0x8] sm:$0xf]
  %v708 = vld [vmem:[%s3 + $0xc] sm:$0xff]
  %v709 = vld [vmem:[%s3 + $0x14] sm:$0xf]
  %v710 = vld [vmem:[%s3 + $0x18] sm:$0xff]
  %v711 = vld [vmem:[%s3 + $0x20] sm:$0xf]
  %v712 = vld [vmem:[%s3 + $0x24] sm:$0xff]
  %v713 = vld [vmem:[%s3 + $0x2c] sm:$0xf]
  %v714 = vld [vmem:[%s3 + $0x30] sm:$0xff]
  %v715 = vld [vmem:[%s3 + $0x38] sm:$0xf]
  %v716 = vld [vmem:[%s3 + $0x3c] sm:$0xff]
  %v717 = vld [vmem:[%s3 + $0x44] sm:$0xf]
  %v718 = vld [vmem:[%s3 + $0x48] sm:$0xff]
  %v719 = vld [vmem:[%s3 + $0x50] sm:$0xf]
  %v720 = vld [vmem:[%s3 + $0x54] sm:$0xff]
  %v721 = vld [vmem:[%s3 + $0x5c] sm:$0xf]
  %v722 = vld [vmem:[%s3 + $0x60] sm:$0xff]
  %v723 = vld [vmem:[%s3 + $0x68] sm:$0xf]
  %v724 = vld [vmem:[%s3 + $0x6c] sm:$0xff]
  %v725 = vld [vmem:[%s3 + $0x74] sm:$0xf]
  %v726 = vld [vmem:[%s3 + $0x78] sm:$0xff]
  %v727 = vld [vmem:[%s3 + $0x80] sm:$0xf]
  %v728 = vld [vmem:[%s3 + $0x84] sm:$0xff]
  %v729 = vld [vmem:[%s3 + $0x8c] sm:$0xf]
  %v730 = vld [vmem:[%s3 + $0x90] sm:$0xff]
  %v731 = vld [vmem:[%s3 + $0x98] sm:$0xf]
  %v732 = vld [vmem:[%s3 + $0x9c] sm:$0xff]
  %v733 = vld [vmem:[%s3 + $0xa4] sm:$0xf]
  %v734 = vld [vmem:[%s3 + $0xa8] sm:$0xff]
  %v735 = vld [vmem:[%s3 + $0xb0] sm:$0xf]
  %v736 = vld [vmem:[%s3 + $0xb4] sm:$0xff]
  %v737 = vld [vmem:[%s3 + $0xbc] sm:$0xf]
  %v738 = vld [vmem:[%s3 + $0xc0] sm:$0xff]
  %v739 = vld [vmem:[%s3 + $0xc8] sm:$0xf]
  %v740 = vld [vmem:[%s3 + $0xcc] sm:$0xff]
  %v741 = vld [vmem:[%s3 + $0xd4] sm:$0xf]
  %v742 = vld [vmem:[%s3 + $0xd8] sm:$0xff]
  %v743 = vld [vmem:[%s3 + $0xe0] sm:$0xf]
  %v744 = vld [vmem:[%s3 + $0xe4] sm:$0xff]
  %v745 = vld [vmem:[%s3 + $0xec] sm:$0xf]
  %v746 = vld [vmem:[%s3 + $0xf0] sm:$0xff]
  %v747 = vld [vmem:[%s3 + $0xf8] sm:$0xf]
  %v748 = vld [vmem:[%s3 + $0xfc] sm:$0xff]
  %v749 = vld [vmem:[%s3 + $0x104] sm:$0xf]
  %v750 = vld [vmem:[%s3 + $0x108] sm:$0xff]
  %v751 = vld [vmem:[%s3 + $0x110] sm:$0xf]
  %v752 = vld [vmem:[%s3 + $0x114] sm:$0xff]
  %v753 = vld [vmem:[%s3 + $0x11c] sm:$0xf]
  %v754 = vld [vmem:[%s3 + $0x120] sm:$0xff]
  %v755 = vld [vmem:[%s3 + $0x128] sm:$0xf]
  %v756 = vld [vmem:[%s3 + $0x12c] sm:$0xff]
  %v757 = vld [vmem:[%s3 + $0x134] sm:$0xf]
  %v758 = vld [vmem:[%s3 + $0x138] sm:$0xff]
  %v759 = vld [vmem:[%s3 + $0x140] sm:$0xf]
  %v760 = vld [vmem:[%s3 + $0x144] sm:$0xff]
  %v761 = vld [vmem:[%s3 + $0x14c] sm:$0xf]
  %v762 = vld [vmem:[%s3 + $0x150] sm:$0xff]
  %v763 = vld [vmem:[%s3 + $0x158] sm:$0xf]
  %v764 = vld [vmem:[%s3 + $0x15c] sm:$0xff]
  %v765 = vld [vmem:[%s3 + $0x164] sm:$0xf]
  %v766 = vld [vmem:[%s3 + $0x168] sm:$0xff]
  %v767 = vld [vmem:[%s3 + $0x170] sm:$0xf]
  %v768 = vld [vmem:[%s3 + $0x174] sm:$0xff]
  %v769 = vld [vmem:[%s3 + $0x17c] sm:$0xf]
  %v770 = vld [vmem:[%s3 + $0x180] sm:$0xff]
  %v771 = vld [vmem:[%s3 + $0x188] sm:$0xf]
  %v772 = vld [vmem:[%s3 + $0x18c] sm:$0xff]
  %v773 = vld [vmem:[%s3 + $0x194] sm:$0xf]
  %v774 = vld [vmem:[%s3 + $0x198] sm:$0xff]
  %v775 = vld [vmem:[%s3 + $0x1a0] sm:$0xf]
  %v776 = vld [vmem:[%s3 + $0x1a4] sm:$0xff]
  %v777 = vld [vmem:[%s3 + $0x1ac] sm:$0xf]
  %v778 = vld [vmem:[%s3 + $0x1b0] sm:$0xff]
  %v779 = vld [vmem:[%s3 + $0x1b8] sm:$0xf]
  %v780 = vld [vmem:[%s3 + $0x1bc] sm:$0x33]
  %v781 = vld [vmem:[%s3 + $0x1c4] sm:$0x3]
  %v782 = vld [vmem:[%s4] sm:$0xff]
  %v783 = vld [vmem:[%s4 + $0x8] sm:$0xff]
  %v784 = vld [vmem:[%s4 + $0x10] sm:$0xff]
  %v785 = vld [vmem:[%s4 + $0x18] sm:$0xff]
  %v786 = vld [vmem:[%s4 + $0x20] sm:$0xff]
  %v787 = vld [vmem:[%s4 + $0x28] sm:$0xff]
  %v788 = vld [vmem:[%s4 + $0x30] sm:$0xff]
  %v789 = vld [vmem:[%s4 + $0x38] sm:$0xff]
  %v790 = vld [vmem:[%s4 + $0x40] sm:$0xff]
  %v791 = vld [vmem:[%s4 + $0x48] sm:$0xff]
  %v792 = vld [vmem:[%s4 + $0x50] sm:$0xff]
  %v793 = vld [vmem:[%s4 + $0x58] sm:$0xff]
  %v794 = vld [vmem:[%s4 + $0x60] sm:$0xff]
  %v795 = vld [vmem:[%s4 + $0x68] sm:$0xff]
  %v796 = vld [vmem:[%s4 + $0x70] sm:$0xff]
  %v797 = vld [vmem:[%s4 + $0x78] sm:$0xff]
  %v798 = vld [vmem:[%s4 + $0x80] sm:$0xff]
  %v799 = vld [vmem:[%s4 + $0x88] sm:$0xff]
  %v800 = vld [vmem:[%s4 + $0x90] sm:$0xff]
  %v801 = vld [vmem:[%s4 + $0x98] sm:$0xff]
  %v802 = vld [vmem:[%s4 + $0xa0] sm:$0xff]
  %v803 = vld [vmem:[%s4 + $0xa8] sm:$0xff]
  %v804 = vld [vmem:[%s4 + $0xb0] sm:$0xff]
  %v805 = vld [vmem:[%s4 + $0xb8] sm:$0xff]
  %v806 = vld [vmem:[%s4 + $0xc0] sm:$0xff]
  %v807 = vld [vmem:[%s4 + $0xc8] sm:$0xff]
  %v808 = vld [vmem:[%s4 + $0xd0] sm:$0xff]
  %v809 = vld [vmem:[%s4 + $0xd8] sm:$0xff]
  %v810 = vld [vmem:[%s4 + $0xe0] sm:$0xff]
  %v811 = vld [vmem:[%s4 + $0xe8] sm:$0xff]
  %v812 = vld [vmem:[%s4 + $0xf0] sm:$0xff]
  %v813 = vld [vmem:[%s4 + $0xf8] sm:$0xff]
  %v814 = vld [vmem:[%s4 + $0x100] sm:$0xff]
  %v815 = vld [vmem:[%s4 + $0x108] sm:$0xff]
  %v816 = vld [vmem:[%s4 + $0x110] sm:$0xff]
  %v817 = vld [vmem:[%s4 + $0x118] sm:$0xff]
  %v818 = vld [vmem:[%s4 + $0x120] sm:$0xff]
  %v819 = vld [vmem:[%s4 + $0x128] sm:$0xf]
  %821 = vset.pattern.permute.xlu0 0
  %822 = vperm.xlu0 %821, %v782
  %v823 = vpop.permute.xlu0 %822
  %826 = vset.pattern.permute.xlu0 0
  %827 = vperm.xlu0 %826, %v783
  %v828 = vpop.permute.xlu0 %827
  %831 = vset.pattern.permute.xlu0 0
  %832 = vperm.xlu0 %831, %v784
  %v833 = vpop.permute.xlu0 %832
  %836 = vset.pattern.permute.xlu0 0
  %837 = vperm.xlu0 %836, %v785
  %v838 = vpop.permute.xlu0 %837
  %841 = vset.pattern.permute.xlu0 0
  %842 = vperm.xlu0 %841, %v786
  %v843 = vpop.permute.xlu0 %842
  %846 = vset.pattern.permute.xlu0 0
  %847 = vperm.xlu0 %846, %v787
  %v848 = vpop.permute.xlu0 %847
  %851 = vset.pattern.permute.xlu0 0
  %852 = vperm.xlu0 %851, %v788
  %v853 = vpop.permute.xlu0 %852
  %856 = vset.pattern.permute.xlu0 0
  %857 = vperm.xlu0 %856, %v789
  %v858 = vpop.permute.xlu0 %857
  %861 = vset.pattern.permute.xlu0 0
  %862 = vperm.xlu0 %861, %v790
  %v863 = vpop.permute.xlu0 %862
  %866 = vset.pattern.permute.xlu0 0
  %867 = vperm.xlu0 %866, %v791
  %v868 = vpop.permute.xlu0 %867
  %871 = vset.pattern.permute.xlu0 0
  %872 = vperm.xlu0 %871, %v792
  %v873 = vpop.permute.xlu0 %872
  %876 = vset.pattern.permute.xlu0 0
  %877 = vperm.xlu0 %876, %v793
  %v878 = vpop.permute.xlu0 %877
  %881 = vset.pattern.permute.xlu0 0
  %882 = vperm.xlu0 %881, %v794
  %v883 = vpop.permute.xlu0 %882
  %886 = vset.pattern.permute.xlu0 0
  %887 = vperm.xlu0 %886, %v795
  %v888 = vpop.permute.xlu0 %887
  %891 = vset.pattern.permute.xlu0 0
  %892 = vperm.xlu0 %891, %v796
  %v893 = vpop.permute.xlu0 %892
  %896 = vset.pattern.permute.xlu0 0
  %897 = vperm.xlu0 %896, %v797
  %v898 = vpop.permute.xlu0 %897
  %901 = vset.pattern.permute.xlu0 0
  %902 = vperm.xlu0 %901, %v798
  %v903 = vpop.permute.xlu0 %902
  %906 = vset.pattern.permute.xlu0 0
  %907 = vperm.xlu0 %906, %v799
  %v908 = vpop.permute.xlu0 %907
  %911 = vset.pattern.permute.xlu0 0
  %912 = vperm.xlu0 %911, %v800
  %v913 = vpop.permute.xlu0 %912
  %916 = vset.pattern.permute.xlu0 0
  %917 = vperm.xlu0 %916, %v801
  %v918 = vpop.permute.xlu0 %917
  %921 = vset.pattern.permute.xlu0 0
  %922 = vperm.xlu0 %921, %v802
  %v923 = vpop.permute.xlu0 %922
  %926 = vset.pattern.permute.xlu0 0
  %927 = vperm.xlu0 %926, %v803
  %v928 = vpop.permute.xlu0 %927
  %931 = vset.pattern.permute.xlu0 0
  %932 = vperm.xlu0 %931, %v804
  %v933 = vpop.permute.xlu0 %932
  %936 = vset.pattern.permute.xlu0 0
  %937 = vperm.xlu0 %936, %v805
  %v938 = vpop.permute.xlu0 %937
  %941 = vset.pattern.permute.xlu0 0
  %942 = vperm.xlu0 %941, %v806
  %v943 = vpop.permute.xlu0 %942
  %946 = vset.pattern.permute.xlu0 0
  %947 = vperm.xlu0 %946, %v807
  %v948 = vpop.permute.xlu0 %947
  %951 = vset.pattern.permute.xlu0 0
  %952 = vperm.xlu0 %951, %v808
  %v953 = vpop.permute.xlu0 %952
  %956 = vset.pattern.permute.xlu0 0
  %957 = vperm.xlu0 %956, %v809
  %v958 = vpop.permute.xlu0 %957
  %961 = vset.pattern.permute.xlu0 0
  %962 = vperm.xlu0 %961, %v810
  %v963 = vpop.permute.xlu0 %962
  %966 = vset.pattern.permute.xlu0 0
  %967 = vperm.xlu0 %966, %v811
  %v968 = vpop.permute.xlu0 %967
  %971 = vset.pattern.permute.xlu0 0
  %972 = vperm.xlu0 %971, %v812
  %v973 = vpop.permute.xlu0 %972
  %976 = vset.pattern.permute.xlu0 0
  %977 = vperm.xlu0 %976, %v813
  %v978 = vpop.permute.xlu0 %977
  %981 = vset.pattern.permute.xlu0 0
  %982 = vperm.xlu0 %981, %v814
  %v983 = vpop.permute.xlu0 %982
  %986 = vset.pattern.permute.xlu0 0
  %987 = vperm.xlu0 %986, %v815
  %v988 = vpop.permute.xlu0 %987
  %991 = vset.pattern.permute.xlu0 0
  %992 = vperm.xlu0 %991, %v816
  %v993 = vpop.permute.xlu0 %992
  %996 = vset.pattern.permute.xlu0 0
  %997 = vperm.xlu0 %996, %v817
  %v998 = vpop.permute.xlu0 %997
  %1001 = vset.pattern.permute.xlu0 0
  %1002 = vperm.xlu0 %1001, %v818
  %v1003 = vpop.permute.xlu0 %1002
  %1006 = vset.pattern.permute.xlu0 0
  %1007 = vperm.xlu0 %1006, %v819
  %v1008 = vpop.permute.xlu0 %1007
  %v1086 = vunpack.c.l.b16 %v706
  %v1087 = vunpack.c.h.b16 %v706
  %v1088 = vunpack.c.l.b16 %v707
  %v1089 = vunpack.c.l.b16 %v708
  %v1090 = vunpack.c.h.b16 %v708
  %v1091 = vunpack.c.l.b16 %v709
  %v1092 = vunpack.c.l.b16 %v710
  %v1093 = vunpack.c.h.b16 %v710
  %v1094 = vunpack.c.l.b16 %v711
  %v1095 = vunpack.c.l.b16 %v712
  %v1096 = vunpack.c.h.b16 %v712
  %v1097 = vunpack.c.l.b16 %v713
  %v1098 = vunpack.c.l.b16 %v714
  %v1099 = vunpack.c.h.b16 %v714
  %v1100 = vunpack.c.l.b16 %v715
  %v1101 = vunpack.c.l.b16 %v716
  %v1102 = vunpack.c.h.b16 %v716
  %v1103 = vunpack.c.l.b16 %v717
  %v1104 = vunpack.c.l.b16 %v718
  %v1105 = vunpack.c.h.b16 %v718
  %v1106 = vunpack.c.l.b16 %v719
  %v1107 = vunpack.c.l.b16 %v720
  %v1108 = vunpack.c.h.b16 %v720
  %v1109 = vunpack.c.l.b16 %v721
  %v1110 = vunpack.c.l.b16 %v722
  %v1111 = vunpack.c.h.b16 %v722
  %v1112 = vunpack.c.l.b16 %v723
  %v1113 = vunpack.c.l.b16 %v724
  %v1114 = vunpack.c.h.b16 %v724
  %v1115 = vunpack.c.l.b16 %v725
  %v1116 = vunpack.c.l.b16 %v726
  %v1117 = vunpack.c.h.b16 %v726
  %v1118 = vunpack.c.l.b16 %v727
  %v1119 = vunpack.c.l.b16 %v728
  %v1120 = vunpack.c.h.b16 %v728
  %v1121 = vunpack.c.l.b16 %v729
  %v1122 = vunpack.c.l.b16 %v730
  %v1123 = vunpack.c.h.b16 %v730
  %v1124 = vunpack.c.l.b16 %v731
  %v1125 = vunpack.c.l.b16 %v732
  %v1126 = vunpack.c.h.b16 %v732
  %v1127 = vunpack.c.l.b16 %v733
  %v1128 = vunpack.c.l.b16 %v734
  %v1129 = vunpack.c.h.b16 %v734
  %v1130 = vunpack.c.l.b16 %v735
  %v1131 = vunpack.c.l.b16 %v736
  %v1132 = vunpack.c.h.b16 %v736
  %v1133 = vunpack.c.l.b16 %v737
  %v1134 = vunpack.c.l.b16 %v738
  %v1135 = vunpack.c.h.b16 %v738
  %v1136 = vunpack.c.l.b16 %v739
  %v1137 = vunpack.c.l.b16 %v740
  %v1138 = vunpack.c.h.b16 %v740
  %v1139 = vunpack.c.l.b16 %v741
  %v1140 = vunpack.c.l.b16 %v742
  %v1141 = vunpack.c.h.b16 %v742
  %v1142 = vunpack.c.l.b16 %v743
  %v1143 = vunpack.c.l.b16 %v744
  %v1144 = vunpack.c.h.b16 %v744
  %v1145 = vunpack.c.l.b16 %v745
  %v1146 = vunpack.c.l.b16 %v746
  %v1147 = vunpack.c.h.b16 %v746
  %v1148 = vunpack.c.l.b16 %v747
  %v1149 = vunpack.c.l.b16 %v748
  %v1150 = vunpack.c.h.b16 %v748
  %v1151 = vunpack.c.l.b16 %v749
  %v1152 = vunpack.c.l.b16 %v750
  %v1153 = vunpack.c.h.b16 %v750
  %v1154 = vunpack.c.l.b16 %v751
  %v1155 = vunpack.c.l.b16 %v752
  %v1156 = vunpack.c.h.b16 %v752
  %v1157 = vunpack.c.l.b16 %v753
  %v1158 = vunpack.c.l.b16 %v754
  %v1159 = vunpack.c.h.b16 %v754
  %v1160 = vunpack.c.l.b16 %v755
  %v1161 = vunpack.c.l.b16 %v756
  %v1162 = vunpack.c.h.b16 %v756
  %v1163 = vunpack.c.l.b16 %v757
  %v1164 = vunpack.c.l.b16 %v758
  %v1165 = vunpack.c.h.b16 %v758
  %v1166 = vunpack.c.l.b16 %v759
  %v1167 = vunpack.c.l.b16 %v760
  %v1168 = vunpack.c.h.b16 %v760
  %v1169 = vunpack.c.l.b16 %v761
  %v1170 = vunpack.c.l.b16 %v762
  %v1171 = vunpack.c.h.b16 %v762
  %v1172 = vunpack.c.l.b16 %v763
  %v1173 = vunpack.c.l.b16 %v764
  %v1174 = vunpack.c.h.b16 %v764
  %v1175 = vunpack.c.l.b16 %v765
  %v1176 = vunpack.c.l.b16 %v766
  %v1177 = vunpack.c.h.b16 %v766
  %v1178 = vunpack.c.l.b16 %v767
  %v1179 = vunpack.c.l.b16 %v768
  %v1180 = vunpack.c.h.b16 %v768
  %v1181 = vunpack.c.l.b16 %v769
  %v1182 = vunpack.c.l.b16 %v770
  %v1183 = vunpack.c.h.b16 %v770
  %v1184 = vunpack.c.l.b16 %v771
  %v1185 = vunpack.c.l.b16 %v772
  %v1186 = vunpack.c.h.b16 %v772
  %v1187 = vunpack.c.l.b16 %v773
  %v1188 = vunpack.c.l.b16 %v774
  %v1189 = vunpack.c.h.b16 %v774
  %v1190 = vunpack.c.l.b16 %v775
  %v1191 = vunpack.c.l.b16 %v776
  %v1192 = vunpack.c.h.b16 %v776
  %v1193 = vunpack.c.l.b16 %v777
  %v1194 = vunpack.c.l.b16 %v778
  %v1195 = vunpack.c.h.b16 %v778
  %v1196 = vunpack.c.l.b16 %v779
  %v1197 = vunpack.c.l.b16 %v780
  %v1198 = vunpack.c.h.b16 %v780
  %v1199 = vunpack.c.l.b16 %v781
  %v1200 = vpack.c.b16 %v1089, %v1086
  %v1201 = vpack.c.b16 %v1090, %v1087
  %v1202 = vpack.c.b16 %v1091, %v1088
  %v1203 = vpack.c.b16 %v1095, %v1092
  %v1204 = vpack.c.b16 %v1096, %v1093
  %v1205 = vpack.c.b16 %v1097, %v1094
  %v1206 = vpack.c.b16 %v1101, %v1098
  %v1207 = vpack.c.b16 %v1102, %v1099
  %v1208 = vpack.c.b16 %v1103, %v1100
  %v1209 = vpack.c.b16 %v1107, %v1104
  %v1210 = vpack.c.b16 %v1108, %v1105
  %v1211 = vpack.c.b16 %v1109, %v1106
  %v1212 = vpack.c.b16 %v1113, %v1110
  %v1213 = vpack.c.b16 %v1114, %v1111
  %v1214 = vpack.c.b16 %v1115, %v1112
  %v1215 = vpack.c.b16 %v1119, %v1116
  %v1216 = vpack.c.b16 %v1120, %v1117
  %v1217 = vpack.c.b16 %v1121, %v1118
  %v1218 = vpack.c.b16 %v1125, %v1122
  %v1219 = vpack.c.b16 %v1126, %v1123
  %v1220 = vpack.c.b16 %v1127, %v1124
  %v1221 = vpack.c.b16 %v1131, %v1128
  %v1222 = vpack.c.b16 %v1132, %v1129
  %v1223 = vpack.c.b16 %v1133, %v1130
  %v1224 = vpack.c.b16 %v1137, %v1134
  %v1225 = vpack.c.b16 %v1138, %v1135
  %v1226 = vpack.c.b16 %v1139, %v1136
  %v1227 = vpack.c.b16 %v1143, %v1140
  %v1228 = vpack.c.b16 %v1144, %v1141
  %v1229 = vpack.c.b16 %v1145, %v1142
  %v1230 = vpack.c.b16 %v1149, %v1146
  %v1231 = vpack.c.b16 %v1150, %v1147
  %v1232 = vpack.c.b16 %v1151, %v1148
  %v1233 = vpack.c.b16 %v1155, %v1152
  %v1234 = vpack.c.b16 %v1156, %v1153
  %v1235 = vpack.c.b16 %v1157, %v1154
  %v1236 = vpack.c.b16 %v1161, %v1158
  %v1237 = vpack.c.b16 %v1162, %v1159
  %v1238 = vpack.c.b16 %v1163, %v1160
  %v1239 = vpack.c.b16 %v1167, %v1164
  %v1240 = vpack.c.b16 %v1168, %v1165
  %v1241 = vpack.c.b16 %v1169, %v1166
  %v1242 = vpack.c.b16 %v1173, %v1170
  %v1243 = vpack.c.b16 %v1174, %v1171
  %v1244 = vpack.c.b16 %v1175, %v1172
  %v1245 = vpack.c.b16 %v1179, %v1176
  %v1246 = vpack.c.b16 %v1180, %v1177
  %v1247 = vpack.c.b16 %v1181, %v1178
  %v1248 = vpack.c.b16 %v1185, %v1182
  %v1249 = vpack.c.b16 %v1186, %v1183
  %v1250 = vpack.c.b16 %v1187, %v1184
  %v1251 = vpack.c.b16 %v1191, %v1188
  %v1252 = vpack.c.b16 %v1192, %v1189
  %v1253 = vpack.c.b16 %v1193, %v1190
  %v1254 = vpack.c.b16 %v1197, %v1194
  %v1255 = vpack.c.b16 %v1198, %v1195
  %v1256 = vpack.c.b16 %v1199, %v1196
  %vm1295 = vcmask 359424
  %v1297 = vsel %vm1295, %v1202, 0
  %v1300 = vsel %vm1295, %v1205, 0
  %v1303 = vsel %vm1295, %v1208, 0
  %v1306 = vsel %vm1295, %v1211, 0
  %v1309 = vsel %vm1295, %v1214, 0
  %v1312 = vsel %vm1295, %v1217, 0
  %v1315 = vsel %vm1295, %v1220, 0
  %v1318 = vsel %vm1295, %v1223, 0
  %v1321 = vsel %vm1295, %v1226, 0
  %v1324 = vsel %vm1295, %v1229, 0
  %v1327 = vsel %vm1295, %v1232, 0
  %v1330 = vsel %vm1295, %v1235, 0
  %v1333 = vsel %vm1295, %v1238, 0
  %v1336 = vsel %vm1295, %v1241, 0
  %v1339 = vsel %vm1295, %v1244, 0
  %v1342 = vsel %vm1295, %v1247, 0
  %v1345 = vsel %vm1295, %v1250, 0
  %v1348 = vsel %vm1295, %v1253, 0
  %v1351 = vsel %vm1295, %v1256, 0
  %vm1353 = vcmask 1045504
  %v1355 = vsel %vm1353, %v705, 0
  %1357 = vmatprep.subr.bf16.mxu0 0
  %1358 = vmatpush1.bf16.msra.mxu0 %v687
  %1359 = vmatprep.subr.bf16.mxu0 0
  %1360 = vmatpush1.bf16.msra.mxu0 %v688
  %1361 = vmatprep.subr.bf16.mxu0 0
  %1362 = vmatpush1.bf16.msra.mxu0 %v689
  %1363 = vmatprep.subr.bf16.mxu0 0
  %1364 = vmatpush1.bf16.msra.mxu0 %v690
  %1365 = vmatprep.subr.bf16.mxu0 0
  %1366 = vmatpush1.bf16.msra.mxu0 %v691
  %1367 = vmatprep.subr.bf16.mxu0 0
  %1368 = vmatpush1.bf16.msra.mxu0 %v692
  %1369 = vmatprep.subr.bf16.mxu0 0
  %1370 = vmatpush1.bf16.msra.mxu0 %v693
  %1371 = vmatprep.subr.bf16.mxu0 0
  %1372 = vmatpush1.bf16.msra.mxu0 %v694
  %1373 = vmatprep.subr.bf16.mxu0 0
  %1374 = vmatpush1.bf16.msra.mxu0 %v695
  %1375 = vmatprep.subr.bf16.mxu0 0
  %1376 = vmatpush1.bf16.msra.mxu0 %v696
  %1377 = vmatprep.subr.bf16.mxu0 0
  %1378 = vmatpush1.bf16.msra.mxu0 %v697
  %1379 = vmatprep.subr.bf16.mxu0 0
  %1380 = vmatpush1.bf16.msra.mxu0 %v698
  %1381 = vmatprep.subr.bf16.mxu0 0
  %1382 = vmatpush1.bf16.msra.mxu0 %v699
  %1383 = vmatprep.subr.bf16.mxu0 0
  %1384 = vmatpush1.bf16.msra.mxu0 %v700
  %1385 = vmatprep.subr.bf16.mxu0 0
  %1386 = vmatpush1.bf16.msra.mxu0 %v701
  %1387 = vmatprep.subr.bf16.mxu0 0
  %1388 = vmatpush1.bf16.msra.mxu0 %v702
  %1389 = vmatprep.mubr.bf16.mxu0 %v1201
  %1390 = vmatmul.mubr.bf16.gmra.mrb[0].mxu0 %v1200
  %v1391 = vpop.f32.mrb[0].mxu0
  %v1392 = vadd.f32 %v823, %v1391
  %v1393 = vpop.f32.mrb[0].mxu0
  %v1394 = vpop.f32.mrb[0].mxu0
  %v1395 = vadd.f32 %v828, %v1394
  %v1396 = vpop.f32.mrb[0].mxu0
  %1397 = vmatprep.mubr.bf16.mxu0 %v1204
  %1398 = vmatmul.mubr.bf16.gmra.mrb[0].mxu0 %v1203
  %v1399 = vpop.f32.mrb[0].mxu0
  %v1400 = vadd.f32 %v833, %v1399
  %v1401 = vpop.f32.mrb[0].mxu0
  %v1402 = vpop.f32.mrb[0].mxu0
  %v1403 = vadd.f32 %v838, %v1402
  %v1404 = vpop.f32.mrb[0].mxu0
  %1405 = vmatprep.mubr.bf16.mxu0 %v1207
  %1406 = vmatmul.mubr.bf16.gmra.mrb[0].mxu0 %v1206
  %v1407 = vpop.f32.mrb[0].mxu0
  %v1408 = vadd.f32 %v843, %v1407
  %v1409 = vpop.f32.mrb[0].mxu0
  %v1410 = vpop.f32.mrb[0].mxu0
  %v1411 = vadd.f32 %v848, %v1410
  %v1412 = vpop.f32.mrb[0].mxu0
  %1413 = vmatprep.mubr.bf16.mxu0 %v1210
  %1414 = vmatmul.mubr.bf16.gmra.mrb[0].mxu0 %v1209
  %v1415 = vpop.f32.mrb[0].mxu0
  %v1416 = vadd.f32 %v853, %v1415
  %v1417 = vpop.f32.mrb[0].mxu0
  %v1418 = vpop.f32.mrb[0].mxu0
  %v1419 = vadd.f32 %v858, %v1418
  %v1420 = vpop.f32.mrb[0].mxu0
  %1421 = vmatprep.mubr.bf16.mxu0 %v1213
  %1422 = vmatmul.mubr.bf16.gmra.mrb[0].mxu0 %v1212
  %v1423 = vpop.f32.mrb[0].mxu0
  %v1424 = vadd.f32 %v863, %v1423
  %v1425 = vpop.f32.mrb[0].mxu0
  %v1426 = vpop.f32.mrb[0].mxu0
  %v1427 = vadd.f32 %v868, %v1426
  %v1428 = vpop.f32.mrb[0].mxu0
  %1429 = vmatprep.mubr.bf16.mxu0 %v1216
  %1430 = vmatmul.mubr.bf16.gmra.mrb[0].mxu0 %v1215
  %v1431 = vpop.f32.mrb[0].mxu0
  %v1432 = vadd.f32 %v873, %v1431
  %v1433 = vpop.f32.mrb[0].mxu0
  %v1434 = vpop.f32.mrb[0].mxu0
  %v1435 = vadd.f32 %v878, %v1434
  %v1436 = vpop.f32.mrb[0].mxu0
  %1437 = vmatprep.mubr.bf16.mxu0 %v1219
  %1438 = vmatmul.mubr.bf16.gmra.mrb[0].mxu0 %v1218
  %v1439 = vpop.f32.mrb[0].mxu0
  %v1440 = vadd.f32 %v883, %v1439
  %v1441 = vpop.f32.mrb[0].mxu0
  %v1442 = vpop.f32.mrb[0].mxu0
  %v1443 = vadd.f32 %v888, %v1442
  %v1444 = vpop.f32.mrb[0].mxu0
  %1445 = vmatprep.mubr.bf16.mxu0 %v1222
  %1446 = vmatmul.mubr.bf16.gmra.mrb[0].mxu0 %v1221
  %v1447 = vpop.f32.mrb[0].mxu0
  %v1448 = vadd.f32 %v893, %v1447
  %v1449 = vpop.f32.mrb[0].mxu0
  %v1450 = vpop.f32.mrb[0].mxu0
  %v1451 = vadd.f32 %v898, %v1450
  %v1452 = vpop.f32.mrb[0].mxu0
  %1453 = vmatprep.mubr.bf16.mxu0 %v1225
  %1454 = vmatmul.mubr.bf16.gmra.mrb[0].mxu0 %v1224
  %v1455 = vpop.f32.mrb[0].mxu0
  %v1456 = vadd.f32 %v903, %v1455
  %v1457 = vpop.f32.mrb[0].mxu0
  %v1458 = vpop.f32.mrb[0].mxu0
  %v1459 = vadd.f32 %v908, %v1458
  %v1460 = vpop.f32.mrb[0].mxu0
  %1461 = vmatprep.mubr.bf16.mxu0 %v1228
  %1462 = vmatmul.mubr.bf16.gmra.mrb[0].mxu0 %v1227
  %v1463 = vpop.f32.mrb[0].mxu0
  %v1464 = vadd.f32 %v913, %v1463
  %v1465 = vpop.f32.mrb[0].mxu0
  %v1466 = vpop.f32.mrb[0].mxu0
  %v1467 = vadd.f32 %v918, %v1466
  %v1468 = vpop.f32.mrb[0].mxu0
  %1469 = vmatprep.mubr.bf16.mxu0 %v1231
  %1470 = vmatmul.mubr.bf16.gmra.mrb[0].mxu0 %v1230
  %v1471 = vpop.f32.mrb[0].mxu0
  %v1472 = vadd.f32 %v923, %v1471
  %v1473 = vpop.f32.mrb[0].mxu0
  %v1474 = vpop.f32.mrb[0].mxu0
  %v1475 = vadd.f32 %v928, %v1474
  %v1476 = vpop.f32.mrb[0].mxu0
  %1477 = vmatprep.mubr.bf16.mxu0 %v1234
  %1478 = vmatmul.mubr.bf16.gmra.mrb[0].mxu0 %v1233
  %v1479 = vpop.f32.mrb[0].mxu0
  %v1480 = vadd.f32 %v933, %v1479
  %v1481 = vpop.f32.mrb[0].mxu0
  %v1482 = vpop.f32.mrb[0].mxu0
  %v1483 = vadd.f32 %v938, %v1482
  %v1484 = vpop.f32.mrb[0].mxu0
  %1485 = vmatprep.mubr.bf16.mxu0 %v1237
  %1486 = vmatmul.mubr.bf16.gmra.mrb[0].mxu0 %v1236
  %v1487 = vpop.f32.mrb[0].mxu0
  %v1488 = vadd.f32 %v943, %v1487
  %v1489 = vpop.f32.mrb[0].mxu0
  %v1490 = vpop.f32.mrb[0].mxu0
  %v1491 = vadd.f32 %v948, %v1490
  %v1492 = vpop.f32.mrb[0].mxu0
  %1493 = vmatprep.mubr.bf16.mxu0 %v1240
  %1494 = vmatmul.mubr.bf16.gmra.mrb[0].mxu0 %v1239
  %v1495 = vpop.f32.mrb[0].mxu0
  %v1496 = vadd.f32 %v953, %v1495
  %v1497 = vpop.f32.mrb[0].mxu0
  %v1498 = vpop.f32.mrb[0].mxu0
  %v1499 = vadd.f32 %v958, %v1498
  %v1500 = vpop.f32.mrb[0].mxu0
  %1501 = vmatprep.mubr.bf16.mxu0 %v1243
  %1502 = vmatmul.mubr.bf16.gmra.mrb[0].mxu0 %v1242
  %v1503 = vpop.f32.mrb[0].mxu0
  %v1504 = vadd.f32 %v963, %v1503
  %v1505 = vpop.f32.mrb[0].mxu0
  %v1506 = vpop.f32.mrb[0].mxu0
  %v1507 = vadd.f32 %v968, %v1506
  %v1508 = vpop.f32.mrb[0].mxu0
  %1509 = vmatprep.mubr.bf16.mxu0 %v1246
  %1510 = vmatmul.mubr.bf16.gmra.mrb[0].mxu0 %v1245
  %v1511 = vpop.f32.mrb[0].mxu0
  %v1512 = vadd.f32 %v973, %v1511
  %v1513 = vpop.f32.mrb[0].mxu0
  %v1514 = vpop.f32.mrb[0].mxu0
  %v1515 = vadd.f32 %v978, %v1514
  %v1516 = vpop.f32.mrb[0].mxu0
  %1517 = vmatprep.mubr.bf16.mxu0 %v1249
  %1518 = vmatmul.mubr.bf16.gmra.mrb[0].mxu0 %v1248
  %v1519 = vpop.f32.mrb[0].mxu0
  %v1520 = vadd.f32 %v983, %v1519
  %v1521 = vpop.f32.mrb[0].mxu0
  %v1522 = vpop.f32.mrb[0].mxu0
  %v1523 = vadd.f32 %v988, %v1522
  %v1524 = vpop.f32.mrb[0].mxu0
  %1525 = vmatprep.mubr.bf16.mxu0 %v1252
  %1526 = vmatmul.mubr.bf16.gmra.mrb[0].mxu0 %v1251
  %v1527 = vpop.f32.mrb[0].mxu0
  %v1528 = vadd.f32 %v993, %v1527
  %v1529 = vpop.f32.mrb[0].mxu0
  %v1530 = vpop.f32.mrb[0].mxu0
  %v1531 = vadd.f32 %v998, %v1530
  %v1532 = vpop.f32.mrb[0].mxu0
  %1533 = vmatprep.mubr.bf16.mxu0 %v1255
  %1534 = vmatmul.mubr.bf16.gmra.mrb[0].mxu0 %v1254
  %v1535 = vpop.f32.mrb[0].mxu0
  %v1536 = vadd.f32 %v1003, %v1535
  %v1537 = vpop.f32.mrb[0].mxu0
  %v1538 = vpop.f32.mrb[0].mxu0
  %v1539 = vadd.f32 %v1008, %v1538
  %v1540 = vpop.f32.mrb[0].mxu0
  %1541 = vdwg.mxu0
  %1542 = vmatprep.subr.bf16.mxu0 0
  %1543 = vmatpush1.bf16.msra.mxu0 %v703
  %1544 = vmatprep.subr.bf16.mxu0 0
  %1545 = vmatpush1.bf16.msra.mxu0 %v704
  %1546 = vmatprep.subr.bf16.mxu0 0
  %1547 = vmatpush1.bf16.msra.mxu0 %v1355
  %1548 = vmatprep.subr.bf16.mxu0 0
  %1549 = vmatpush1.bf16.msra.mxu0 0
  %1550 = vmatprep.subr.bf16.mxu0 0
  %1551 = vmatpush1.bf16.msra.mxu0 0
  %1552 = vmatprep.subr.bf16.mxu0 0
  %1553 = vmatpush1.bf16.msra.mxu0 0
  %1554 = vmatprep.subr.bf16.mxu0 0
  %1555 = vmatpush1.bf16.msra.mxu0 0
  %1556 = vmatprep.subr.bf16.mxu0 0
  %1557 = vmatpush1.bf16.msra.mxu0 0
  %1558 = vmatprep.subr.bf16.mxu0 0
  %1559 = vmatpush1.bf16.msra.mxu0 0
  %1560 = vmatprep.subr.bf16.mxu0 0
  %1561 = vmatpush1.bf16.msra.mxu0 0
  %1562 = vmatprep.subr.bf16.mxu0 0
  %1563 = vmatpush1.bf16.msra.mxu0 0
  %1564 = vmatprep.subr.bf16.mxu0 0
  %1565 = vmatpush1.bf16.msra.mxu0 0
  %1566 = vmatprep.subr.bf16.mxu0 0
  %1567 = vmatpush1.bf16.msra.mxu0 0
  %1568 = vmatprep.subr.bf16.mxu0 0
  %1569 = vmatpush1.bf16.msra.mxu0 0
  %1570 = vmatprep.subr.bf16.mxu0 0
  %1571 = vmatpush1.bf16.msra.mxu0 0
  %1572 = vmatprep.subr.bf16.mxu0 0
  %1573 = vmatpush1.bf16.msra.mxu0 0
  %1574 = vmatprep.mubr.bf16.mxu0 0
  %1575 = vmatmul.mubr.bf16.gmra.mrb[0].mxu0 %v1297
  %v1576 = vpop.f32.mrb[0].mxu0
  %v1577 = vadd.f32 %v1392, %v1576
  %v1578 = vpop.f32.mrb[0].mxu0
  %v1579 = vpop.f32.mrb[0].mxu0
  %v1580 = vadd.f32 %v1395, %v1579
  %v1581 = vpop.f32.mrb[0].mxu0
  %1582 = vmatprep.mubr.bf16.mxu0 0
  %1583 = vmatmul.mubr.bf16.gmra.mrb[0].mxu0 %v1300
  %v1584 = vpop.f32.mrb[0].mxu0
  %v1585 = vadd.f32 %v1400, %v1584
  %v1586 = vpop.f32.mrb[0].mxu0
  %v1587 = vpop.f32.mrb[0].mxu0
  %v1588 = vadd.f32 %v1403, %v1587
  %v1589 = vpop.f32.mrb[0].mxu0
  %1590 = vmatprep.mubr.bf16.mxu0 0
  %1591 = vmatmul.mubr.bf16.gmra.mrb[0].mxu0 %v1303
  %v1592 = vpop.f32.mrb[0].mxu0
  %v1593 = vadd.f32 %v1408, %v1592
  %v1594 = vpop.f32.mrb[0].mxu0
  %v1595 = vpop.f32.mrb[0].mxu0
  %v1596 = vadd.f32 %v1411, %v1595
  %v1597 = vpop.f32.mrb[0].mxu0
  %1598 = vmatprep.mubr.bf16.mxu0 0
  %1599 = vmatmul.mubr.bf16.gmra.mrb[0].mxu0 %v1306
  %v1600 = vpop.f32.mrb[0].mxu0
  %v1601 = vadd.f32 %v1416, %v1600
  %v1602 = vpop.f32.mrb[0].mxu0
  %v1603 = vpop.f32.mrb[0].mxu0
  %v1604 = vadd.f32 %v1419, %v1603
  %v1605 = vpop.f32.mrb[0].mxu0
  %1606 = vmatprep.mubr.bf16.mxu0 0
  %1607 = vmatmul.mubr.bf16.gmra.mrb[0].mxu0 %v1309
  %v1608 = vpop.f32.mrb[0].mxu0
  %v1609 = vadd.f32 %v1424, %v1608
  %v1610 = vpop.f32.mrb[0].mxu0
  %v1611 = vpop.f32.mrb[0].mxu0
  %v1612 = vadd.f32 %v1427, %v1611
  %v1613 = vpop.f32.mrb[0].mxu0
  %1614 = vmatprep.mubr.bf16.mxu0 0
  %1615 = vmatmul.mubr.bf16.gmra.mrb[0].mxu0 %v1312
  %v1616 = vpop.f32.mrb[0].mxu0
  %v1617 = vadd.f32 %v1432, %v1616
  %v1618 = vpop.f32.mrb[0].mxu0
  %v1619 = vpop.f32.mrb[0].mxu0
  %v1620 = vadd.f32 %v1435, %v1619
  %v1621 = vpop.f32.mrb[0].mxu0
  %1622 = vmatprep.mubr.bf16.mxu0 0
  %1623 = vmatmul.mubr.bf16.gmra.mrb[0].mxu0 %v1315
  %v1624 = vpop.f32.mrb[0].mxu0
  %v1625 = vadd.f32 %v1440, %v1624
  %v1626 = vpop.f32.mrb[0].mxu0
  %v1627 = vpop.f32.mrb[0].mxu0
  %v1628 = vadd.f32 %v1443, %v1627
  %v1629 = vpop.f32.mrb[0].mxu0
  %1630 = vmatprep.mubr.bf16.mxu0 0
  %1631 = vmatmul.mubr.bf16.gmra.mrb[0].mxu0 %v1318
  %v1632 = vpop.f32.mrb[0].mxu0
  %v1633 = vadd.f32 %v1448, %v1632
  %v1634 = vpop.f32.mrb[0].mxu0
  %v1635 = vpop.f32.mrb[0].mxu0
  %v1636 = vadd.f32 %v1451, %v1635
  %v1637 = vpop.f32.mrb[0].mxu0
  %1638 = vmatprep.mubr.bf16.mxu0 0
  %1639 = vmatmul.mubr.bf16.gmra.mrb[0].mxu0 %v1321
  %v1640 = vpop.f32.mrb[0].mxu0
  %v1641 = vadd.f32 %v1456, %v1640
  %v1642 = vpop.f32.mrb[0].mxu0
  %v1643 = vpop.f32.mrb[0].mxu0
  %v1644 = vadd.f32 %v1459, %v1643
  %v1645 = vpop.f32.mrb[0].mxu0
  %1646 = vmatprep.mubr.bf16.mxu0 0
  %1647 = vmatmul.mubr.bf16.gmra.mrb[0].mxu0 %v1324
  %v1648 = vpop.f32.mrb[0].mxu0
  %v1649 = vadd.f32 %v1464, %v1648
  %v1650 = vpop.f32.mrb[0].mxu0
  %v1651 = vpop.f32.mrb[0].mxu0
  %v1652 = vadd.f32 %v1467, %v1651
  %v1653 = vpop.f32.mrb[0].mxu0
  %1654 = vmatprep.mubr.bf16.mxu0 0
  %1655 = vmatmul.mubr.bf16.gmra.mrb[0].mxu0 %v1327
  %v1656 = vpop.f32.mrb[0].mxu0
  %v1657 = vadd.f32 %v1472, %v1656
  %v1658 = vpop.f32.mrb[0].mxu0
  %v1659 = vpop.f32.mrb[0].mxu0
  %v1660 = vadd.f32 %v1475, %v1659
  %v1661 = vpop.f32.mrb[0].mxu0
  %1662 = vmatprep.mubr.bf16.mxu0 0
  %1663 = vmatmul.mubr.bf16.gmra.mrb[0].mxu0 %v1330
  %v1664 = vpop.f32.mrb[0].mxu0
  %v1665 = vadd.f32 %v1480, %v1664
  %v1666 = vpop.f32.mrb[0].mxu0
  %v1667 = vpop.f32.mrb[0].mxu0
  %v1668 = vadd.f32 %v1483, %v1667
  %v1669 = vpop.f32.mrb[0].mxu0
  %1670 = vmatprep.mubr.bf16.mxu0 0
  %1671 = vmatmul.mubr.bf16.gmra.mrb[0].mxu0 %v1333
  %v1672 = vpop.f32.mrb[0].mxu0
  %v1673 = vadd.f32 %v1488, %v1672
  %v1674 = vpop.f32.mrb[0].mxu0
  %v1675 = vpop.f32.mrb[0].mxu0
  %v1676 = vadd.f32 %v1491, %v1675
  %v1677 = vpop.f32.mrb[0].mxu0
  %1678 = vmatprep.mubr.bf16.mxu0 0
  %1679 = vmatmul.mubr.bf16.gmra.mrb[0].mxu0 %v1336
  %v1680 = vpop.f32.mrb[0].mxu0
  %v1681 = vadd.f32 %v1496, %v1680
  %v1682 = vpop.f32.mrb[0].mxu0
  %v1683 = vpop.f32.mrb[0].mxu0
  %v1684 = vadd.f32 %v1499, %v1683
  %v1685 = vpop.f32.mrb[0].mxu0
  %1686 = vmatprep.mubr.bf16.mxu0 0
  %1687 = vmatmul.mubr.bf16.gmra.mrb[0].mxu0 %v1339
  %v1688 = vpop.f32.mrb[0].mxu0
  %v1689 = vadd.f32 %v1504, %v1688
  %v1690 = vpop.f32.mrb[0].mxu0
  %v1691 = vpop.f32.mrb[0].mxu0
  %v1692 = vadd.f32 %v1507, %v1691
  %v1693 = vpop.f32.mrb[0].mxu0
  %1694 = vmatprep.mubr.bf16.mxu0 0
  %1695 = vmatmul.mubr.bf16.gmra.mrb[0].mxu0 %v1342
  %v1696 = vpop.f32.mrb[0].mxu0
  %v1697 = vadd.f32 %v1512, %v1696
  %v1698 = vpop.f32.mrb[0].mxu0
  %v1699 = vpop.f32.mrb[0].mxu0
  %v1700 = vadd.f32 %v1515, %v1699
  %v1701 = vpop.f32.mrb[0].mxu0
  %1702 = vmatprep.mubr.bf16.mxu0 0
  %1703 = vmatmul.mubr.bf16.gmra.mrb[0].mxu0 %v1345
  %v1704 = vpop.f32.mrb[0].mxu0
  %v1705 = vadd.f32 %v1520, %v1704
  %v1706 = vpop.f32.mrb[0].mxu0
  %v1707 = vpop.f32.mrb[0].mxu0
  %v1708 = vadd.f32 %v1523, %v1707
  %v1709 = vpop.f32.mrb[0].mxu0
  %1710 = vmatprep.mubr.bf16.mxu0 0
  %1711 = vmatmul.mubr.bf16.gmra.mrb[0].mxu0 %v1348
  %v1712 = vpop.f32.mrb[0].mxu0
  %v1713 = vadd.f32 %v1528, %v1712
  %v1714 = vpop.f32.mrb[0].mxu0
  %v1715 = vpop.f32.mrb[0].mxu0
  %v1716 = vadd.f32 %v1531, %v1715
  %v1717 = vpop.f32.mrb[0].mxu0
  %1718 = vmatprep.mubr.bf16.mxu0 0
  %1719 = vmatmul.mubr.bf16.gmra.mrb[0].mxu0 %v1351
  %v1720 = vpop.f32.mrb[0].mxu0
  %v1721 = vadd.f32 %v1536, %v1720
  %v1722 = vpop.f32.mrb[0].mxu0
  %v1723 = vpop.f32.mrb[0].mxu0
  %v1724 = vadd.f32 %v1539, %v1723
  %v1725 = vpop.f32.mrb[0].mxu0
  %1726 = vdwg.mxu0
  %v1727 = vmax.f32 %v1577, 0.0
  %v1728 = vmax.f32 %v1580, 0.0
  %v1729 = vmax.f32 %v1585, 0.0
  %v1730 = vmax.f32 %v1588, 0.0
  %v1731 = vmax.f32 %v1593, 0.0
  %v1732 = vmax.f32 %v1596, 0.0
  %v1733 = vmax.f32 %v1601, 0.0
  %v1734 = vmax.f32 %v1604, 0.0
  %v1735 = vmax.f32 %v1609, 0.0
  %v1736 = vmax.f32 %v1612, 0.0
  %v1737 = vmax.f32 %v1617, 0.0
  %v1738 = vmax.f32 %v1620, 0.0
  %v1739 = vmax.f32 %v1625, 0.0
  %v1740 = vmax.f32 %v1628, 0.0
  %v1741 = vmax.f32 %v1633, 0.0
  %v1742 = vmax.f32 %v1636, 0.0
  %v1743 = vmax.f32 %v1641, 0.0
  %v1744 = vmax.f32 %v1644, 0.0
  %v1745 = vmax.f32 %v1649, 0.0
  %v1746 = vmax.f32 %v1652, 0.0
  %v1747 = vmax.f32 %v1657, 0.0
  %v1748 = vmax.f32 %v1660, 0.0
  %v1749 = vmax.f32 %v1665, 0.0
  %v1750 = vmax.f32 %v1668, 0.0
  %v1751 = vmax.f32 %v1673, 0.0
  %v1752 = vmax.f32 %v1676, 0.0
  %v1753 = vmax.f32 %v1681, 0.0
  %v1754 = vmax.f32 %v1684, 0.0
  %v1755 = vmax.f32 %v1689, 0.0
  %v1756 = vmax.f32 %v1692, 0.0
  %v1757 = vmax.f32 %v1697, 0.0
  %v1758 = vmax.f32 %v1700, 0.0
  %v1759 = vmax.f32 %v1705, 0.0
  %v1760 = vmax.f32 %v1708, 0.0
  %v1761 = vmax.f32 %v1713, 0.0
  %v1762 = vmax.f32 %v1716, 0.0
  %v1763 = vmax.f32 %v1721, 0.0
  %v1764 = vmax.f32 %v1724, 0.0
  %v1765 = vld [vmem:[%s5] sm:$0xff]
  %v1766 = vld [vmem:[%s5 + $0x8] sm:$0xff]
  %v1767 = vld [vmem:[%s5 + $0x10] sm:$0xff]
  %v1768 = vld [vmem:[%s5 + $0x18] sm:$0xff]
  %v1769 = vld [vmem:[%s5 + $0x20] sm:$0xff]
  %v1770 = vld [vmem:[%s5 + $0x28] sm:$0xff]
  %v1771 = vld [vmem:[%s5 + $0x30] sm:$0xff]
  %v1772 = vld [vmem:[%s5 + $0x38] sm:$0xff]
  %v1773 = vld [vmem:[%s5 + $0x40] sm:$0xff]
  %v1774 = vld [vmem:[%s5 + $0x48] sm:$0xff]
  %v1775 = vld [vmem:[%s5 + $0x50] sm:$0xff]
  %v1776 = vld [vmem:[%s5 + $0x58] sm:$0xff]
  %v1777 = vld [vmem:[%s5 + $0x60] sm:$0xff]
  %v1778 = vld [vmem:[%s5 + $0x68] sm:$0xff]
  %v1779 = vld [vmem:[%s5 + $0x70] sm:$0xff]
  %v1780 = vld [vmem:[%s5 + $0x78] sm:$0xff]
  %v1781 = vld [vmem:[%s5 + $0x80] sm:$0xff]
  %v1782 = vld [vmem:[%s5 + $0x88] sm:$0xff]
  %v1783 = vld [vmem:[%s5 + $0x90] sm:$0xff]
  %v1784 = vld [vmem:[%s5 + $0x98] sm:$0xff]
  %v1785 = vld [vmem:[%s5 + $0xa0] sm:$0xff]
  %v1786 = vld [vmem:[%s5 + $0xa8] sm:$0xff]
  %v1787 = vld [vmem:[%s5 + $0xb0] sm:$0xff]
  %v1788 = vld [vmem:[%s5 + $0xb8] sm:$0xff]
  %v1789 = vld [vmem:[%s5 + $0xc0] sm:$0xff]
  %v1790 = vld [vmem:[%s5 + $0xc8] sm:$0xff]
  %v1791 = vld [vmem:[%s5 + $0xd0] sm:$0xff]
  %v1792 = vld [vmem:[%s5 + $0xd8] sm:$0xff]
  %v1793 = vld [vmem:[%s5 + $0xe0] sm:$0xff]
  %v1794 = vld [vmem:[%s5 + $0xe8] sm:$0xff]
  %v1795 = vld [vmem:[%s5 + $0xf0] sm:$0xff]
  %v1796 = vld [vmem:[%s5 + $0xf8] sm:$0xff]
  %v1797 = vld [vmem:[%s5 + $0x100] sm:$0xff]
  %v1798 = vld [vmem:[%s5 + $0x108] sm:$0xff]
  %v1799 = vld [vmem:[%s5 + $0x110] sm:$0xff]
  %v1800 = vld [vmem:[%s5 + $0x118] sm:$0xff]
  %v1801 = vld [vmem:[%s5 + $0x120] sm:$0xff]
  %v1802 = vld [vmem:[%s5 + $0x128] sm:$0xf]
  %1804 = vset.pattern.permute.xlu0 0
  %1805 = vperm.xlu0 %1804, %v1765
  %v1806 = vpop.permute.xlu0 %1805
  %1809 = vset.pattern.permute.xlu0 0
  %1810 = vperm.xlu0 %1809, %v1766
  %v1811 = vpop.permute.xlu0 %1810
  %1814 = vset.pattern.permute.xlu0 0
  %1815 = vperm.xlu0 %1814, %v1767
  %v1816 = vpop.permute.xlu0 %1815
  %1819 = vset.pattern.permute.xlu0 0
  %1820 = vperm.xlu0 %1819, %v1768
  %v1821 = vpop.permute.xlu0 %1820
  %1824 = vset.pattern.permute.xlu0 0
  %1825 = vperm.xlu0 %1824, %v1769
  %v1826 = vpop.permute.xlu0 %1825
  %1829 = vset.pattern.permute.xlu0 0
  %1830 = vperm.xlu0 %1829, %v1770
  %v1831 = vpop.permute.xlu0 %1830
  %1834 = vset.pattern.permute.xlu0 0
  %1835 = vperm.xlu0 %1834, %v1771
  %v1836 = vpop.permute.xlu0 %1835
  %1839 = vset.pattern.permute.xlu0 0
  %1840 = vperm.xlu0 %1839, %v1772
  %v1841 = vpop.permute.xlu0 %1840
  %1844 = vset.pattern.permute.xlu0 0
  %1845 = vperm.xlu0 %1844, %v1773
  %v1846 = vpop.permute.xlu0 %1845
  %1849 = vset.pattern.permute.xlu0 0
  %1850 = vperm.xlu0 %1849, %v1774
  %v1851 = vpop.permute.xlu0 %1850
  %1854 = vset.pattern.permute.xlu0 0
  %1855 = vperm.xlu0 %1854, %v1775
  %v1856 = vpop.permute.xlu0 %1855
  %1859 = vset.pattern.permute.xlu0 0
  %1860 = vperm.xlu0 %1859, %v1776
  %v1861 = vpop.permute.xlu0 %1860
  %1864 = vset.pattern.permute.xlu0 0
  %1865 = vperm.xlu0 %1864, %v1777
  %v1866 = vpop.permute.xlu0 %1865
  %1869 = vset.pattern.permute.xlu0 0
  %1870 = vperm.xlu0 %1869, %v1778
  %v1871 = vpop.permute.xlu0 %1870
  %1874 = vset.pattern.permute.xlu0 0
  %1875 = vperm.xlu0 %1874, %v1779
  %v1876 = vpop.permute.xlu0 %1875
  %1879 = vset.pattern.permute.xlu0 0
  %1880 = vperm.xlu0 %1879, %v1780
  %v1881 = vpop.permute.xlu0 %1880
  %1884 = vset.pattern.permute.xlu0 0
  %1885 = vperm.xlu0 %1884, %v1781
  %v1886 = vpop.permute.xlu0 %1885
  %1889 = vset.pattern.permute.xlu0 0
  %1890 = vperm.xlu0 %1889, %v1782
  %v1891 = vpop.permute.xlu0 %1890
  %1894 = vset.pattern.permute.xlu0 0
  %1895 = vperm.xlu0 %1894, %v1783
  %v1896 = vpop.permute.xlu0 %1895
  %1899 = vset.pattern.permute.xlu0 0
  %1900 = vperm.xlu0 %1899, %v1784
  %v1901 = vpop.permute.xlu0 %1900
  %1904 = vset.pattern.permute.xlu0 0
  %1905 = vperm.xlu0 %1904, %v1785
  %v1906 = vpop.permute.xlu0 %1905
  %1909 = vset.pattern.permute.xlu0 0
  %1910 = vperm.xlu0 %1909, %v1786
  %v1911 = vpop.permute.xlu0 %1910
  %1914 = vset.pattern.permute.xlu0 0
  %1915 = vperm.xlu0 %1914, %v1787
  %v1916 = vpop.permute.xlu0 %1915
  %1919 = vset.pattern.permute.xlu0 0
  %1920 = vperm.xlu0 %1919, %v1788
  %v1921 = vpop.permute.xlu0 %1920
  %1924 = vset.pattern.permute.xlu0 0
  %1925 = vperm.xlu0 %1924, %v1789
  %v1926 = vpop.permute.xlu0 %1925
  %1929 = vset.pattern.permute.xlu0 0
  %1930 = vperm.xlu0 %1929, %v1790
  %v1931 = vpop.permute.xlu0 %1930
  %1934 = vset.pattern.permute.xlu0 0
  %1935 = vperm.xlu0 %1934, %v1791
  %v1936 = vpop.permute.xlu0 %1935
  %1939 = vset.pattern.permute.xlu0 0
  %1940 = vperm.xlu0 %1939, %v1792
  %v1941 = vpop.permute.xlu0 %1940
  %1944 = vset.pattern.permute.xlu0 0
  %1945 = vperm.xlu0 %1944, %v1793
  %v1946 = vpop.permute.xlu0 %1945
  %1949 = vset.pattern.permute.xlu0 0
  %1950 = vperm.xlu0 %1949, %v1794
  %v1951 = vpop.permute.xlu0 %1950
  %1954 = vset.pattern.permute.xlu0 0
  %1955 = vperm.xlu0 %1954, %v1795
  %v1956 = vpop.permute.xlu0 %1955
  %1959 = vset.pattern.permute.xlu0 0
  %1960 = vperm.xlu0 %1959, %v1796
  %v1961 = vpop.permute.xlu0 %1960
  %1964 = vset.pattern.permute.xlu0 0
  %1965 = vperm.xlu0 %1964, %v1797
  %v1966 = vpop.permute.xlu0 %1965
  %1969 = vset.pattern.permute.xlu0 0
  %1970 = vperm.xlu0 %1969, %v1798
  %v1971 = vpop.permute.xlu0 %1970
  %1974 = vset.pattern.permute.xlu0 0
  %1975 = vperm.xlu0 %1974, %v1799
  %v1976 = vpop.permute.xlu0 %1975
  %1979 = vset.pattern.permute.xlu0 0
  %1980 = vperm.xlu0 %1979, %v1800
  %v1981 = vpop.permute.xlu0 %1980
  %1984 = vset.pattern.permute.xlu0 0
  %1985 = vperm.xlu0 %1984, %v1801
  %v1986 = vpop.permute.xlu0 %1985
  %1989 = vset.pattern.permute.xlu0 0
  %1990 = vperm.xlu0 %1989, %v1802
  %v1991 = vpop.permute.xlu0 %1990
  %v1993 = vmul.f32 %v1727, %v1806
  %v1994 = vmul.f32 %v1728, %v1811
  %v1995 = vmul.f32 %v1729, %v1816
  %v1996 = vmul.f32 %v1730, %v1821
  %v1997 = vmul.f32 %v1731, %v1826
  %v1998 = vmul.f32 %v1732, %v1831
  %v1999 = vmul.f32 %v1733, %v1836
  %v2000 = vmul.f32 %v1734, %v1841
  %v2001 = vmul.f32 %v1735, %v1846
  %v2002 = vmul.f32 %v1736, %v1851
  %v2003 = vmul.f32 %v1737, %v1856
  %v2004 = vmul.f32 %v1738, %v1861
  %v2005 = vmul.f32 %v1739, %v1866
  %v2006 = vmul.f32 %v1740, %v1871
  %v2007 = vmul.f32 %v1741, %v1876
  %v2008 = vmul.f32 %v1742, %v1881
  %v2009 = vmul.f32 %v1743, %v1886
  %v2010 = vmul.f32 %v1744, %v1891
  %v2011 = vmul.f32 %v1745, %v1896
  %v2012 = vmul.f32 %v1746, %v1901
  %v2013 = vmul.f32 %v1747, %v1906
  %v2014 = vmul.f32 %v1748, %v1911
  %v2015 = vmul.f32 %v1749, %v1916
  %v2016 = vmul.f32 %v1750, %v1921
  %v2017 = vmul.f32 %v1751, %v1926
  %v2018 = vmul.f32 %v1752, %v1931
  %v2019 = vmul.f32 %v1753, %v1936
  %v2020 = vmul.f32 %v1754, %v1941
  %v2021 = vmul.f32 %v1755, %v1946
  %v2022 = vmul.f32 %v1756, %v1951
  %v2023 = vmul.f32 %v1757, %v1956
  %v2024 = vmul.f32 %v1758, %v1961
  %v2025 = vmul.f32 %v1759, %v1966
  %v2026 = vmul.f32 %v1760, %v1971
  %v2027 = vmul.f32 %v1761, %v1976
  %v2028 = vmul.f32 %v1762, %v1981
  %v2029 = vmul.f32 %v1763, %v1986
  %v2030 = vmul.f32 %v1764, %v1991
  %v2031 = vadd.f32 %v1993, %v1994
  %v2032 = vadd.f32 %v2031, %v1995
  %v2033 = vadd.f32 %v2032, %v1996
  %v2034 = vadd.f32 %v2033, %v1997
  %v2035 = vadd.f32 %v2034, %v1998
  %v2036 = vadd.f32 %v2035, %v1999
  %v2037 = vadd.f32 %v2036, %v2000
  %v2038 = vadd.f32 %v2037, %v2001
  %v2039 = vadd.f32 %v2038, %v2002
  %v2040 = vadd.f32 %v2039, %v2003
  %v2041 = vadd.f32 %v2040, %v2004
  %v2042 = vadd.f32 %v2041, %v2005
  %v2043 = vadd.f32 %v2042, %v2006
  %v2044 = vadd.f32 %v2043, %v2007
  %v2045 = vadd.f32 %v2044, %v2008
  %v2046 = vadd.f32 %v2045, %v2009
  %v2047 = vadd.f32 %v2046, %v2010
  %v2048 = vadd.f32 %v2047, %v2011
  %v2049 = vadd.f32 %v2048, %v2012
  %v2050 = vadd.f32 %v2049, %v2013
  %v2051 = vadd.f32 %v2050, %v2014
  %v2052 = vadd.f32 %v2051, %v2015
  %v2053 = vadd.f32 %v2052, %v2016
  %v2054 = vadd.f32 %v2053, %v2017
  %v2055 = vadd.f32 %v2054, %v2018
  %v2056 = vadd.f32 %v2055, %v2019
  %v2057 = vadd.f32 %v2056, %v2020
  %v2058 = vadd.f32 %v2057, %v2021
  %v2059 = vadd.f32 %v2058, %v2022
  %v2060 = vadd.f32 %v2059, %v2023
  %v2061 = vadd.f32 %v2060, %v2024
  %v2062 = vadd.f32 %v2061, %v2025
  %v2063 = vadd.f32 %v2062, %v2026
  %v2064 = vadd.f32 %v2063, %v2027
  %v2065 = vadd.f32 %v2064, %v2028
  %v2066 = vadd.f32 %v2065, %v2029
  %vm2067 = vcmask 1043456
  %v2068 = vsel %vm2067, %v2030, 0.0
  %v2069 = vadd.f32 %v2066, %v2068
  %v2070 = vrot.slane %v2069, 4
  %v2071 = vadd.f32 %v2069, %v2070
  %v2072 = vrot.slane %v2071, 2
  %v2073 = vadd.f32 %v2071, %v2072
  %v2074 = vrot.slane %v2073, 1
  %v2075 = vadd.f32 %v2073, %v2074
  %v2076 = vld [vmem:[#allocation2] sm:$0x1]
  %2078 = vset.pattern.permute.xlu0 0
  %2079 = vperm.xlu0 %2078, %v2076
  %v2080 = vpop.permute.xlu0 %2079
  %v2082 = vlaneseq
  %v2083 = vshrl.u32 %v2082, 7
  %v2084 = vsub.s32 0, %v2083
  %v2085 = vrot.slane %v2080, %v2084
  %v2086 = vadd.f32 %v2075, %v2085
  %2087 = vst [vmem:[%s7] sm:$0x1] %v2086
  // Predicated region
  $region30: #{three_layer_net_forward.1} parent=0 // pred_check
    _
  $region31: #{three_layer_net_forward.1} parent=0 // pred_check_branch
    %2089 = sbr.rel (0) target = $region33
  $region32: #{three_layer_net_forward.1} parent=0 // pred_region
    _
  $region33: #{three_layer_net_forward.1} parent=0 // pred_fallthru
    _
  // Predicated region
  $region34: #{three_layer_net_forward.1} parent=0 // pred_check
    _
  $region35: #{three_layer_net_forward.1} parent=0 // pred_check_branch
    %2091 = sbr.rel (0) target = $region37
  $region36: #{three_layer_net_forward.1} parent=0 // pred_region
    _
  $region37: #{three_layer_net_forward.1} parent=0 // pred_fallthru
    _

</llo_original>
